<compile_context>
chip_gen: v7x
topology: tpu7x:2x2x1
jax: 0.10.0
libtpu: 0.0.40
codegen_flags: <defaults>
</compile_context>

<pallas_src>
import functools

import jax
import jax.numpy as jnp
from jax import lax
from jax.experimental import pallas as pl
from jax.experimental.pallas import tpu as pltpu


def _basic_block_kernel(col_ref, pix_ref, x_ref, w1_ref, s1_ref, b1_ref,
                        w2_ref, s2_ref, b2_ref, o_ref, *, H, W):
    """One grid step = `block_n` images packed along the lane axis.

    x_ref block: (1, C, L) with L = block_n * H * W.  Each 3x3 conv is a
    single MXU matmul (C, 9C) @ (9C, L); the 9 shifted windows (taps) are
    generated with pltpu.roll along the packed lane axis and invalid
    (out-of-image) lanes are zeroed with precomputed geometry masks.
    """
    x2d = x_ref[0]                         # (C, L)
    C, L = x2d.shape

    w1 = w1_ref[...]                       # (C, 9C)  tap-major columns
    w2 = w2_ref[...]                       # (C, 9C)
    s1 = s1_ref[...]                       # (C, 1)   folded BN1 scale
    b1 = b1_ref[...]                       # (C, 1)   folded BN1 bias
    s2 = s2_ref[...]                       # (C, 1)
    b2 = b2_ref[...]                       # (C, 1)

    # Geometry-only per-lane indices (precomputed in the wrapper):
    #   col = w coordinate inside the lane's own image
    #   pix = flat in-image index h*W + w
    col = col_ref[...]                     # (1, L) int32
    pix = pix_ref[...]                     # (1, L) int32

    # Build the 9 tap descriptors once (shared by both convs).
    taps = []                              # [(flattened shift, mask or None)]
    for dy in range(3):
        for dx in range(3):
            off = (dy - 1) * W + (dx - 1)
            conds = []
            if dy == 0:
                conds.append(pix >= W)              # h - 1 >= 0
            elif dy == 2:
                conds.append(pix < (H - 1) * W)     # h + 1 <= H - 1
            if dx == 0:
                conds.append(col >= 1)              # w - 1 >= 0
            elif dx == 2:
                conds.append(col <= W - 2)          # w + 1 <= W - 1
            mask = None
            for c in conds:
                mask = c if mask is None else jnp.logical_and(mask, c)
            taps.append((off, mask))

    def im2col(t):
        """(C, L) -> (9C, L) patch matrix for a 3x3 / stride-1 / pad-1 conv."""
        cols = []
        for off, mask in taps:
            # Roll over the packed lane axis; lanes that would read across an
            # image boundary (or wrap around) are exactly the masked lanes.
            shifted = t if off == 0 else pltpu.roll(t, (-off) % L, 1)
            if mask is not None:
                shifted = jnp.where(mask, shifted, 0.0)
            cols.append(shifted)
        return jnp.concatenate(cols, axis=0)

    # conv1 + BN1 + ReLU   (single MXU matmul, f32 accumulation).
    # TODO(synk): at real ResNet channel counts feed bf16 operands here (keep
    # preferred_element_type=f32) to halve HBM traffic.
    y = jnp.dot(w1, im2col(x2d), preferred_element_type=jnp.float32)
    y = jnp.maximum(y * s1 + b1, 0.0)

    # conv2 + BN2.
    z = jnp.dot(w2, im2col(y), preferred_element_type=jnp.float32)
    z = z * s2 + b2

    # Identity residual + ReLU (stride=1, Cin == Cout only -- asserted in the
    # wrapper; the downsample path is an external nn.Sequential in the spec).
    o_ref[0] = jnp.maximum(z + x2d, 0.0)


def basic_block(x_nchw, w1_oihw, gamma1, beta1, mean1, var1,
                w2_oihw, gamma2, beta2, mean2, var2,
                *, block_n, eps=1e-5):
    """Fused residual basic block.  x_nchw: (N, C, H, W) f32;
    w*_oihw: (C, C, 3, 3) conv weights; BN params: (C,) each."""
    N, C, H, W = x_nchw.shape
    HW = H * W
    assert w1_oihw.shape == (C, C, 3, 3) and w2_oihw.shape == (C, C, 3, 3)
    assert N % block_n == 0
    G = N // block_n
    L = block_n * HW

    # --- wrapper-side layout plumbing (no compute hoisted out of the kernel)
    # NCHW -> (G, C, block_n*H*W): images of a grid step concatenated on lanes.
    x_blk = (x_nchw.reshape(G, block_n, C, HW)
             .transpose(0, 2, 1, 3)
             .reshape(G, C, L))

    # OIHW -> (Cout, 9*Cin), columns ordered (kh, kw, cin) to match im2col.
    w1_2d = jnp.transpose(w1_oihw, (0, 2, 3, 1)).reshape(C, 9 * C)
    w2_2d = jnp.transpose(w2_oihw, (0, 2, 3, 1)).reshape(C, 9 * C)

    # Fold inference BatchNorm into per-channel scale/bias: y = x*scale + bias.
    inv1 = gamma1 / jnp.sqrt(var1 + eps)
    scale1 = inv1.reshape(C, 1)
    bias1 = (beta1 - mean1 * inv1).reshape(C, 1)
    inv2 = gamma2 / jnp.sqrt(var2 + eps)
    scale2 = inv2.reshape(C, 1)
    bias2 = (beta2 - mean2 * inv2).reshape(C, 1)

    # Per-lane geometry indices (shared by all grid steps, both convs).
    lane = jnp.arange(L, dtype=jnp.int32)
    col_idx = (lane % W).reshape(1, L)     # in-image w coordinate
    pix_idx = (lane % HW).reshape(1, L)    # in-image flat index h*W + w

    kernel = functools.partial(_basic_block_kernel, H=H, W=W)

    # VMEM per step: x + out blocks = 2 * C * L * 4B (double-buffered) plus
    # tiny weight/BN blocks -- trivial here.  For real ResNet tiles re-derive
    # block_n against v7x's 64 MiB VMEM and set vmem_limit_bytes explicitly.
    out_blk = pl.pallas_call(
        kernel,
        out_shape=jax.ShapeDtypeStruct((G, C, L), jnp.float32),
        grid_spec=pltpu.PrefetchScalarGridSpec(
            num_scalar_prefetch=0,
            grid=(G,),
            in_specs=[
                pl.BlockSpec((1, L), lambda g: (0, 0)),            # col_idx
                pl.BlockSpec((1, L), lambda g: (0, 0)),            # pix_idx
                pl.BlockSpec((1, C, L), lambda g: (g, 0, 0)),      # x
                pl.BlockSpec((C, 9 * C), lambda g: (0, 0)),        # w1
                pl.BlockSpec((C, 1), lambda g: (0, 0)),            # scale1
                pl.BlockSpec((C, 1), lambda g: (0, 0)),            # bias1
                pl.BlockSpec((C, 9 * C), lambda g: (0, 0)),        # w2
                pl.BlockSpec((C, 1), lambda g: (0, 0)),            # scale2
                pl.BlockSpec((C, 1), lambda g: (0, 0)),            # bias2
            ],
            out_specs=pl.BlockSpec((1, C, L), lambda g: (g, 0, 0)),
        ),
        compiler_params=pltpu.CompilerParams(
            # Batch blocks are independent -> shard across v7x's 2 TCs.
            dimension_semantics=("parallel",)),
    )(col_idx, pix_idx, x_blk, w1_2d, scale1, bias1, w2_2d, scale2, bias2)

    # (G, C, block_n*HW) -> NCHW.
    return (out_blk.reshape(G, C, block_n, HW)
            .transpose(0, 2, 1, 3)
            .reshape(N, C, H, W))


def _reference_nchw(x, w1, g1, be1, m1, v1, w2, g2, be2, m2, v2, eps=1e-5):
    """Pure-JAX NCHW reference for the residual basic block."""
    dn = lax.conv_dimension_numbers(x.shape, w1.shape, ("NCHW", "OIHW", "NCHW"))

    def bn(t, g, b, m, v):
        inv = g / jnp.sqrt(v + eps)
        return t * inv[None, :, None, None] + (b - m * inv)[None, :, None, None]

    out = lax.conv_general_dilated(x, w1, (1, 1), ((1, 1), (1, 1)),
                                   dimension_numbers=dn)
    out = jnp.maximum(bn(out, g1, be1, m1, v1), 0.0)
    out = lax.conv_general_dilated(out, w2, (1, 1), ((1, 1), (1, 1)),
                                   dimension_numbers=dn)
    out = bn(out, g2, be2, m2, v2)
    return jnp.maximum(out + x, 0.0)


if __name__ == "__main__":
    # Small shapes consistent with a stride-1 residual block; batch large
    # enough to exercise multi-image packing and a parallel grid.
    N, C, H, W = 8, 4, 16, 16
    BLOCK_N = 4            # images packed per grid step (lane axis = 1024)
    eps = 1e-5

    key = jax.random.PRNGKey(0)
    (kx, kw1, kw2, kg1, kb1, km1, kv1,
     kg2, kb2, km2, kv2) = jax.random.split(key, 11)

    # PyTorch-style NCHW input and OIHW conv weights.
    x = jax.random.normal(kx, (N, C, H, W), jnp.float32)
    std = (2.0 / (9 * C)) ** 0.5
    w1 = jax.random.normal(kw1, (C, C, 3, 3), jnp.float32) * std
    w2 = jax.random.normal(kw2, (C, C, 3, 3), jnp.float32) * std
    gamma1 = 1.0 + 0.1 * jax.random.normal(kg1, (C,), jnp.float32)
    beta1 = 0.1 * jax.random.normal(kb1, (C,), jnp.float32)
    mean1 = 0.1 * jax.random.normal(km1, (C,), jnp.float32)
    var1 = 1.0 + 0.1 * jax.random.uniform(kv1, (C,), jnp.float32)
    gamma2 = 1.0 + 0.1 * jax.random.normal(kg2, (C,), jnp.float32)
    beta2 = 0.1 * jax.random.normal(kb2, (C,), jnp.float32)
    mean2 = 0.1 * jax.random.normal(km2, (C,), jnp.float32)
    var2 = 1.0 + 0.1 * jax.random.uniform(kv2, (C,), jnp.float32)

    out = basic_block(x, w1, gamma1, beta1, mean1, var1,
                      w2, gamma2, beta2, mean2, var2,
                      block_n=BLOCK_N, eps=eps)
    out = jax.block_until_ready(out)

    ref = _reference_nchw(x, w1, gamma1, beta1, mean1, var1,
                          w2, gamma2, beta2, mean2, var2, eps)
    ref = jax.block_until_ready(ref)

    assert out.shape == (N, C, H, W)
    err = float(jnp.max(jnp.abs(out - ref)))
    assert err < 1e-3, f"mismatch vs. XLA conv reference: {err}"
    print("KERNEL_OK")
</pallas_src>

<mosaic_0001>
module attributes {stable_mosaic.version = 11 : i64} {
  func.func @_basic_block_kernel(%arg0: i32, %arg1: memref<1x1024xi32, #tpu.memory_space<vmem>>, %arg2: memref<1x1024xi32, #tpu.memory_space<vmem>>, %arg3: memref<1x4x1024xf32, #tpu.memory_space<vmem>>, %arg4: memref<4x36xf32, #tpu.memory_space<vmem>>, %arg5: memref<4x1xf32, #tpu.memory_space<vmem>>, %arg6: memref<4x1xf32, #tpu.memory_space<vmem>>, %arg7: memref<4x36xf32, #tpu.memory_space<vmem>>, %arg8: memref<4x1xf32, #tpu.memory_space<vmem>>, %arg9: memref<4x1xf32, #tpu.memory_space<vmem>>, %arg10: memref<1x4x1024xf32, #tpu.memory_space<vmem>>) attributes {dimension_semantics = [#tpu.dimension_semantics<parallel>], iteration_bounds = array<i64: 2>, scalar_prefetch = 0 : i64, scratch_operands = 0 : i64, tpu.core_type = #tpu.core_type<tc>, window_params = [{pipeline_mode = #tpu.pipeline_mode<synchronous>, transform_indices = @transform_0, window_bounds = array<i64: 1, 1024>}, {pipeline_mode = #tpu.pipeline_mode<synchronous>, transform_indices = @transform_1, window_bounds = array<i64: 1, 1024>}, {transform_indices = @transform_2, window_bounds = array<i64: 1, 4, 1024>}, {pipeline_mode = #tpu.pipeline_mode<synchronous>, transform_indices = @transform_3, window_bounds = array<i64: 4, 36>}, {pipeline_mode = #tpu.pipeline_mode<synchronous>, transform_indices = @transform_4, window_bounds = array<i64: 4, 1>}, {pipeline_mode = #tpu.pipeline_mode<synchronous>, transform_indices = @transform_5, window_bounds = array<i64: 4, 1>}, {pipeline_mode = #tpu.pipeline_mode<synchronous>, transform_indices = @transform_6, window_bounds = array<i64: 4, 36>}, {pipeline_mode = #tpu.pipeline_mode<synchronous>, transform_indices = @transform_7, window_bounds = array<i64: 4, 1>}, {pipeline_mode = #tpu.pipeline_mode<synchronous>, transform_indices = @transform_8, window_bounds = array<i64: 4, 1>}, {transform_indices = @transform_9, window_bounds = array<i64: 1, 4, 1024>}]} {
    %c0 = arith.constant 0 : index
    %c0_0 = arith.constant 0 : index
    %c0_1 = arith.constant 0 : index
    %0 = vector.load %arg3[%c0, %c0_0, %c0_1] : memref<1x4x1024xf32, #tpu.memory_space<vmem>>, vector<1x4x1024xf32>
    %1 = vector.shape_cast %0 : vector<1x4x1024xf32> to vector<4x1024xf32>
    %c0_2 = arith.constant 0 : index
    %c0_3 = arith.constant 0 : index
    %2 = vector.load %arg4[%c0_2, %c0_3] : memref<4x36xf32, #tpu.memory_space<vmem>>, vector<4x36xf32>
    %c0_4 = arith.constant 0 : index
    %c0_5 = arith.constant 0 : index
    %3 = vector.load %arg7[%c0_4, %c0_5] : memref<4x36xf32, #tpu.memory_space<vmem>>, vector<4x36xf32>
    %c0_6 = arith.constant 0 : index
    %c0_7 = arith.constant 0 : index
    %4 = vector.load %arg5[%c0_6, %c0_7] : memref<4x1xf32, #tpu.memory_space<vmem>>, vector<4x1xf32>
    %c0_8 = arith.constant 0 : index
    %c0_9 = arith.constant 0 : index
    %5 = vector.load %arg6[%c0_8, %c0_9] : memref<4x1xf32, #tpu.memory_space<vmem>>, vector<4x1xf32>
    %c0_10 = arith.constant 0 : index
    %c0_11 = arith.constant 0 : index
    %6 = vector.load %arg8[%c0_10, %c0_11] : memref<4x1xf32, #tpu.memory_space<vmem>>, vector<4x1xf32>
    %c0_12 = arith.constant 0 : index
    %c0_13 = arith.constant 0 : index
    %7 = vector.load %arg9[%c0_12, %c0_13] : memref<4x1xf32, #tpu.memory_space<vmem>>, vector<4x1xf32>
    %c0_14 = arith.constant 0 : index
    %c0_15 = arith.constant 0 : index
    %8 = vector.load %arg1[%c0_14, %c0_15] : memref<1x1024xi32, #tpu.memory_space<vmem>>, vector<1x1024xi32>
    %c0_16 = arith.constant 0 : index
    %c0_17 = arith.constant 0 : index
    %9 = vector.load %arg2[%c0_16, %c0_17] : memref<1x1024xi32, #tpu.memory_space<vmem>>, vector<1x1024xi32>
    %c16_i32 = arith.constant 16 : i32
    %10 = vector.broadcast %c16_i32 : i32 to vector<1x1024xi32>
    %11 = arith.cmpi sge, %9, %10 : vector<1x1024xi32>
    %c1_i32 = arith.constant 1 : i32
    %12 = vector.broadcast %c1_i32 : i32 to vector<1x1024xi32>
    %13 = arith.cmpi sge, %8, %12 : vector<1x1024xi32>
    %14 = arith.andi %11, %13 : vector<1x1024xi1>
    %c16_i32_18 = arith.constant 16 : i32
    %15 = vector.broadcast %c16_i32_18 : i32 to vector<1x1024xi32>
    %16 = arith.cmpi sge, %9, %15 : vector<1x1024xi32>
    %c16_i32_19 = arith.constant 16 : i32
    %17 = vector.broadcast %c16_i32_19 : i32 to vector<1x1024xi32>
    %18 = arith.cmpi sge, %9, %17 : vector<1x1024xi32>
    %c14_i32 = arith.constant 14 : i32
    %19 = vector.broadcast %c14_i32 : i32 to vector<1x1024xi32>
    %20 = arith.cmpi sle, %8, %19 : vector<1x1024xi32>
    %21 = arith.andi %18, %20 : vector<1x1024xi1>
    %c1_i32_20 = arith.constant 1 : i32
    %22 = vector.broadcast %c1_i32_20 : i32 to vector<1x1024xi32>
    %23 = arith.cmpi sge, %8, %22 : vector<1x1024xi32>
    %c14_i32_21 = arith.constant 14 : i32
    %24 = vector.broadcast %c14_i32_21 : i32 to vector<1x1024xi32>
    %25 = arith.cmpi sle, %8, %24 : vector<1x1024xi32>
    %c240_i32 = arith.constant 240 : i32
    %26 = vector.broadcast %c240_i32 : i32 to vector<1x1024xi32>
    %27 = arith.cmpi slt, %9, %26 : vector<1x1024xi32>
    %c1_i32_22 = arith.constant 1 : i32
    %28 = vector.broadcast %c1_i32_22 : i32 to vector<1x1024xi32>
    %29 = arith.cmpi sge, %8, %28 : vector<1x1024xi32>
    %30 = arith.andi %27, %29 : vector<1x1024xi1>
    %c240_i32_23 = arith.constant 240 : i32
    %31 = vector.broadcast %c240_i32_23 : i32 to vector<1x1024xi32>
    %32 = arith.cmpi slt, %9, %31 : vector<1x1024xi32>
    %c240_i32_24 = arith.constant 240 : i32
    %33 = vector.broadcast %c240_i32_24 : i32 to vector<1x1024xi32>
    %34 = arith.cmpi slt, %9, %33 : vector<1x1024xi32>
    %c14_i32_25 = arith.constant 14 : i32
    %35 = vector.broadcast %c14_i32_25 : i32 to vector<1x1024xi32>
    %36 = arith.cmpi sle, %8, %35 : vector<1x1024xi32>
    %37 = arith.andi %34, %36 : vector<1x1024xi1>
    %c17_i32 = arith.constant 17 : i32
    %38 = tpu.dynamic_rotate %1 by %c17_i32 dim 1 : vector<4x1024xf32>, i32 -> vector<4x1024xf32>
    %cst = arith.constant 0.000000e+00 : f32
    %39 = vector.shape_cast %14 : vector<1x1024xi1> to vector<1x1024xi1>
    %40 = vector.broadcast %39 : vector<1x1024xi1> to vector<4x1024xi1>
    %41 = vector.broadcast %cst : f32 to vector<4x1024xf32>
    %42 = arith.select %40, %38, %41 : vector<4x1024xi1>, vector<4x1024xf32>
    %c16_i32_26 = arith.constant 16 : i32
    %43 = tpu.dynamic_rotate %1 by %c16_i32_26 dim 1 : vector<4x1024xf32>, i32 -> vector<4x1024xf32>
    %cst_27 = arith.constant 0.000000e+00 : f32
    %44 = vector.shape_cast %16 : vector<1x1024xi1> to vector<1x1024xi1>
    %45 = vector.broadcast %44 : vector<1x1024xi1> to vector<4x1024xi1>
    %46 = vector.broadcast %cst_27 : f32 to vector<4x1024xf32>
    %47 = arith.select %45, %43, %46 : vector<4x1024xi1>, vector<4x1024xf32>
    %c15_i32 = arith.constant 15 : i32
    %48 = tpu.dynamic_rotate %1 by %c15_i32 dim 1 : vector<4x1024xf32>, i32 -> vector<4x1024xf32>
    %cst_28 = arith.constant 0.000000e+00 : f32
    %49 = vector.shape_cast %21 : vector<1x1024xi1> to vector<1x1024xi1>
    %50 = vector.broadcast %49 : vector<1x1024xi1> to vector<4x1024xi1>
    %51 = vector.broadcast %cst_28 : f32 to vector<4x1024xf32>
    %52 = arith.select %50, %48, %51 : vector<4x1024xi1>, vector<4x1024xf32>
    %c1_i32_29 = arith.constant 1 : i32
    %53 = tpu.dynamic_rotate %1 by %c1_i32_29 dim 1 : vector<4x1024xf32>, i32 -> vector<4x1024xf32>
    %cst_30 = arith.constant 0.000000e+00 : f32
    %54 = vector.shape_cast %23 : vector<1x1024xi1> to vector<1x1024xi1>
    %55 = vector.broadcast %54 : vector<1x1024xi1> to vector<4x1024xi1>
    %56 = vector.broadcast %cst_30 : f32 to vector<4x1024xf32>
    %57 = arith.select %55, %53, %56 : vector<4x1024xi1>, vector<4x1024xf32>
    %c1023_i32 = arith.constant 1023 : i32
    %58 = tpu.dynamic_rotate %1 by %c1023_i32 dim 1 : vector<4x1024xf32>, i32 -> vector<4x1024xf32>
    %cst_31 = arith.constant 0.000000e+00 : f32
    %59 = vector.shape_cast %25 : vector<1x1024xi1> to vector<1x1024xi1>
    %60 = vector.broadcast %59 : vector<1x1024xi1> to vector<4x1024xi1>
    %61 = vector.broadcast %cst_31 : f32 to vector<4x1024xf32>
    %62 = arith.select %60, %58, %61 : vector<4x1024xi1>, vector<4x1024xf32>
    %c1009_i32 = arith.constant 1009 : i32
    %63 = tpu.dynamic_rotate %1 by %c1009_i32 dim 1 : vector<4x1024xf32>, i32 -> vector<4x1024xf32>
    %cst_32 = arith.constant 0.000000e+00 : f32
    %64 = vector.shape_cast %30 : vector<1x1024xi1> to vector<1x1024xi1>
    %65 = vector.broadcast %64 : vector<1x1024xi1> to vector<4x1024xi1>
    %66 = vector.broadcast %cst_32 : f32 to vector<4x1024xf32>
    %67 = arith.select %65, %63, %66 : vector<4x1024xi1>, vector<4x1024xf32>
    %c1008_i32 = arith.constant 1008 : i32
    %68 = tpu.dynamic_rotate %1 by %c1008_i32 dim 1 : vector<4x1024xf32>, i32 -> vector<4x1024xf32>
    %cst_33 = arith.constant 0.000000e+00 : f32
    %69 = vector.shape_cast %32 : vector<1x1024xi1> to vector<1x1024xi1>
    %70 = vector.broadcast %69 : vector<1x1024xi1> to vector<4x1024xi1>
    %71 = vector.broadcast %cst_33 : f32 to vector<4x1024xf32>
    %72 = arith.select %70, %68, %71 : vector<4x1024xi1>, vector<4x1024xf32>
    %c1007_i32 = arith.constant 1007 : i32
    %73 = tpu.dynamic_rotate %1 by %c1007_i32 dim 1 : vector<4x1024xf32>, i32 -> vector<4x1024xf32>
    %cst_34 = arith.constant 0.000000e+00 : f32
    %74 = vector.shape_cast %37 : vector<1x1024xi1> to vector<1x1024xi1>
    %75 = vector.broadcast %74 : vector<1x1024xi1> to vector<4x1024xi1>
    %76 = vector.broadcast %cst_34 : f32 to vector<4x1024xf32>
    %77 = arith.select %75, %73, %76 : vector<4x1024xi1>, vector<4x1024xf32>
    %78 = tpu.concatenate %42, %47, %52, %57, %1, %62, %67, %72, %77 in 0 : vector<4x1024xf32>, vector<4x1024xf32>, vector<4x1024xf32>, vector<4x1024xf32>, vector<4x1024xf32>, vector<4x1024xf32>, vector<4x1024xf32>, vector<4x1024xf32>, vector<4x1024xf32> -> vector<36x1024xf32>
    %cst_35 = arith.constant dense<0.000000e+00> : vector<4x1024xf32>
    %79 = tpu.matmul %2, %78, %cst_35 {dimension_numbers = #tpu.dot_dimension_numbers<[1], [0], [0], [1], [0, 0, 1, 1], [], []>} : vector<4x36xf32>, vector<36x1024xf32>, vector<4x1024xf32> -> vector<4x1024xf32>
    %80 = vector.broadcast %4 : vector<4x1xf32> to vector<4x1024xf32>
    %81 = arith.mulf %79, %80 : vector<4x1024xf32>
    %82 = vector.broadcast %5 : vector<4x1xf32> to vector<4x1024xf32>
    %83 = arith.addf %81, %82 : vector<4x1024xf32>
    %cst_36 = arith.constant 0.000000e+00 : f32
    %84 = vector.broadcast %cst_36 : f32 to vector<4x1024xf32>
    %85 = arith.maximumf %83, %84 : vector<4x1024xf32>
    %c17_i32_37 = arith.constant 17 : i32
    %86 = tpu.dynamic_rotate %85 by %c17_i32_37 dim 1 : vector<4x1024xf32>, i32 -> vector<4x1024xf32>
    %cst_38 = arith.constant 0.000000e+00 : f32
    %87 = vector.shape_cast %14 : vector<1x1024xi1> to vector<1x1024xi1>
    %88 = vector.broadcast %87 : vector<1x1024xi1> to vector<4x1024xi1>
    %89 = vector.broadcast %cst_38 : f32 to vector<4x1024xf32>
    %90 = arith.select %88, %86, %89 : vector<4x1024xi1>, vector<4x1024xf32>
    %c16_i32_39 = arith.constant 16 : i32
    %91 = tpu.dynamic_rotate %85 by %c16_i32_39 dim 1 : vector<4x1024xf32>, i32 -> vector<4x1024xf32>
    %cst_40 = arith.constant 0.000000e+00 : f32
    %92 = vector.shape_cast %16 : vector<1x1024xi1> to vector<1x1024xi1>
    %93 = vector.broadcast %92 : vector<1x1024xi1> to vector<4x1024xi1>
    %94 = vector.broadcast %cst_40 : f32 to vector<4x1024xf32>
    %95 = arith.select %93, %91, %94 : vector<4x1024xi1>, vector<4x1024xf32>
    %c15_i32_41 = arith.constant 15 : i32
    %96 = tpu.dynamic_rotate %85 by %c15_i32_41 dim 1 : vector<4x1024xf32>, i32 -> vector<4x1024xf32>
    %cst_42 = arith.constant 0.000000e+00 : f32
    %97 = vector.shape_cast %21 : vector<1x1024xi1> to vector<1x1024xi1>
    %98 = vector.broadcast %97 : vector<1x1024xi1> to vector<4x1024xi1>
    %99 = vector.broadcast %cst_42 : f32 to vector<4x1024xf32>
    %100 = arith.select %98, %96, %99 : vector<4x1024xi1>, vector<4x1024xf32>
    %c1_i32_43 = arith.constant 1 : i32
    %101 = tpu.dynamic_rotate %85 by %c1_i32_43 dim 1 : vector<4x1024xf32>, i32 -> vector<4x1024xf32>
    %cst_44 = arith.constant 0.000000e+00 : f32
    %102 = vector.shape_cast %23 : vector<1x1024xi1> to vector<1x1024xi1>
    %103 = vector.broadcast %102 : vector<1x1024xi1> to vector<4x1024xi1>
    %104 = vector.broadcast %cst_44 : f32 to vector<4x1024xf32>
    %105 = arith.select %103, %101, %104 : vector<4x1024xi1>, vector<4x1024xf32>
    %c1023_i32_45 = arith.constant 1023 : i32
    %106 = tpu.dynamic_rotate %85 by %c1023_i32_45 dim 1 : vector<4x1024xf32>, i32 -> vector<4x1024xf32>
    %cst_46 = arith.constant 0.000000e+00 : f32
    %107 = vector.shape_cast %25 : vector<1x1024xi1> to vector<1x1024xi1>
    %108 = vector.broadcast %107 : vector<1x1024xi1> to vector<4x1024xi1>
    %109 = vector.broadcast %cst_46 : f32 to vector<4x1024xf32>
    %110 = arith.select %108, %106, %109 : vector<4x1024xi1>, vector<4x1024xf32>
    %c1009_i32_47 = arith.constant 1009 : i32
    %111 = tpu.dynamic_rotate %85 by %c1009_i32_47 dim 1 : vector<4x1024xf32>, i32 -> vector<4x1024xf32>
    %cst_48 = arith.constant 0.000000e+00 : f32
    %112 = vector.shape_cast %30 : vector<1x1024xi1> to vector<1x1024xi1>
    %113 = vector.broadcast %112 : vector<1x1024xi1> to vector<4x1024xi1>
    %114 = vector.broadcast %cst_48 : f32 to vector<4x1024xf32>
    %115 = arith.select %113, %111, %114 : vector<4x1024xi1>, vector<4x1024xf32>
    %c1008_i32_49 = arith.constant 1008 : i32
    %116 = tpu.dynamic_rotate %85 by %c1008_i32_49 dim 1 : vector<4x1024xf32>, i32 -> vector<4x1024xf32>
    %cst_50 = arith.constant 0.000000e+00 : f32
    %117 = vector.shape_cast %32 : vector<1x1024xi1> to vector<1x1024xi1>
    %118 = vector.broadcast %117 : vector<1x1024xi1> to vector<4x1024xi1>
    %119 = vector.broadcast %cst_50 : f32 to vector<4x1024xf32>
    %120 = arith.select %118, %116, %119 : vector<4x1024xi1>, vector<4x1024xf32>
    %c1007_i32_51 = arith.constant 1007 : i32
    %121 = tpu.dynamic_rotate %85 by %c1007_i32_51 dim 1 : vector<4x1024xf32>, i32 -> vector<4x1024xf32>
    %cst_52 = arith.constant 0.000000e+00 : f32
    %122 = vector.shape_cast %37 : vector<1x1024xi1> to vector<1x1024xi1>
    %123 = vector.broadcast %122 : vector<1x1024xi1> to vector<4x1024xi1>
    %124 = vector.broadcast %cst_52 : f32 to vector<4x1024xf32>
    %125 = arith.select %123, %121, %124 : vector<4x1024xi1>, vector<4x1024xf32>
    %126 = tpu.concatenate %90, %95, %100, %105, %85, %110, %115, %120, %125 in 0 : vector<4x1024xf32>, vector<4x1024xf32>, vector<4x1024xf32>, vector<4x1024xf32>, vector<4x1024xf32>, vector<4x1024xf32>, vector<4x1024xf32>, vector<4x1024xf32>, vector<4x1024xf32> -> vector<36x1024xf32>
    %cst_53 = arith.constant dense<0.000000e+00> : vector<4x1024xf32>
    %127 = tpu.matmul %3, %126, %cst_53 {dimension_numbers = #tpu.dot_dimension_numbers<[1], [0], [0], [1], [0, 0, 1, 1], [], []>} : vector<4x36xf32>, vector<36x1024xf32>, vector<4x1024xf32> -> vector<4x1024xf32>
    %128 = vector.broadcast %6 : vector<4x1xf32> to vector<4x1024xf32>
    %129 = arith.mulf %127, %128 : vector<4x1024xf32>
    %130 = vector.broadcast %7 : vector<4x1xf32> to vector<4x1024xf32>
    %131 = arith.addf %129, %130 : vector<4x1024xf32>
    %132 = arith.addf %131, %1 : vector<4x1024xf32>
    %cst_54 = arith.constant 0.000000e+00 : f32
    %133 = vector.broadcast %cst_54 : f32 to vector<4x1024xf32>
    %134 = arith.maximumf %132, %133 : vector<4x1024xf32>
    %c0_55 = arith.constant 0 : index
    %c0_56 = arith.constant 0 : index
    %c0_57 = arith.constant 0 : index
    %135 = vector.load %arg10[%c0_55, %c0_56, %c0_57] : memref<1x4x1024xf32, #tpu.memory_space<vmem>>, vector<1x4x1024xf32>
    %136 = vector.shape_cast %135 : vector<1x4x1024xf32> to vector<4x1024xf32>
    %137 = vector.shape_cast %134 : vector<4x1024xf32> to vector<1x4x1024xf32>
    tpu.vector_store %arg10[%c0_55, %c0_56, %c0_57], %137 {strides = array<i32>} : memref<1x4x1024xf32, #tpu.memory_space<vmem>>, vector<1x4x1024xf32>,
    return
  }
  func.func @transform_0(%arg0: i32) -> (i32, i32) {
    %c0_i32 = arith.constant 0 : i32
    %c0_i32_0 = arith.constant 0 : i32
    %c0_i32_1 = arith.constant 0 : i32
    return %c0_i32, %c0_i32_0 : i32, i32
  }
  func.func @transform_1(%arg0: i32) -> (i32, i32) {
    %c0_i32 = arith.constant 0 : i32
    %c0_i32_0 = arith.constant 0 : i32
    %c0_i32_1 = arith.constant 0 : i32
    return %c0_i32, %c0_i32_0 : i32, i32
  }
  func.func @transform_2(%arg0: i32) -> (i32, i32, i32) {
    %c0_i32 = arith.constant 0 : i32
    %c0_i32_0 = arith.constant 0 : i32
    %c0_i32_1 = arith.constant 0 : i32
    return %arg0, %c0_i32, %c0_i32_0 : i32, i32, i32
  }
  func.func @transform_3(%arg0: i32) -> (i32, i32) {
    %c0_i32 = arith.constant 0 : i32
    %c0_i32_0 = arith.constant 0 : i32
    %c0_i32_1 = arith.constant 0 : i32
    return %c0_i32, %c0_i32_0 : i32, i32
  }
  func.func @transform_4(%arg0: i32) -> (i32, i32) {
    %c0_i32 = arith.constant 0 : i32
    %c0_i32_0 = arith.constant 0 : i32
    %c0_i32_1 = arith.constant 0 : i32
    return %c0_i32, %c0_i32_0 : i32, i32
  }
  func.func @transform_5(%arg0: i32) -> (i32, i32) {
    %c0_i32 = arith.constant 0 : i32
    %c0_i32_0 = arith.constant 0 : i32
    %c0_i32_1 = arith.constant 0 : i32
    return %c0_i32, %c0_i32_0 : i32, i32
  }
  func.func @transform_6(%arg0: i32) -> (i32, i32) {
    %c0_i32 = arith.constant 0 : i32
    %c0_i32_0 = arith.constant 0 : i32
    %c0_i32_1 = arith.constant 0 : i32
    return %c0_i32, %c0_i32_0 : i32, i32
  }
  func.func @transform_7(%arg0: i32) -> (i32, i32) {
    %c0_i32 = arith.constant 0 : i32
    %c0_i32_0 = arith.constant 0 : i32
    %c0_i32_1 = arith.constant 0 : i32
    return %c0_i32, %c0_i32_0 : i32, i32
  }
  func.func @transform_8(%arg0: i32) -> (i32, i32) {
    %c0_i32 = arith.constant 0 : i32
    %c0_i32_0 = arith.constant 0 : i32
    %c0_i32_1 = arith.constant 0 : i32
    return %c0_i32, %c0_i32_0 : i32, i32
  }
  func.func @transform_9(%arg0: i32) -> (i32, i32, i32) {
    %c0_i32 = arith.constant 0 : i32
    %c0_i32_0 = arith.constant 0 : i32
    %c0_i32_1 = arith.constant 0 : i32
    return %arg0, %c0_i32, %c0_i32_0 : i32, i32, i32
  }
}

</mosaic_0001>

<llo_original>
// kernel: tpu_custom_call.1
$region0: #{tpu_custom_call.1}
  #allocation0 [shape = 'u32[]', space=smem, size = 0x4, offset = 0x4, fixed_abs, tag = 'smem constant byte address 0x4 - core index']
  #allocation1 [shape = 'u32[144,128]{1,0:T(1,128)}', space=vmem, size = 0x12000, scoped, tag = 'internal scratch']
  %s0 = inlined_call_operand.vmem [shape: s32[1,1024], index: 0, kind: input, shape index: {}]
  %s1 = inlined_call_operand.vmem [shape: s32[1,1024], index: 1, kind: input, shape index: {}]
  %s2 = inlined_call_operand.hbm [shape: f32[2,4,1024], index: 2, kind: input, shape index: {}]
  %s3 = inlined_call_operand.vmem [shape: f32[4,36], index: 3, kind: input, shape index: {}]
  %s4 = inlined_call_operand.vmem [shape: f32[4,1], index: 4, kind: input, shape index: {}]
  %s5 = inlined_call_operand.vmem [shape: f32[4,1], index: 5, kind: input, shape index: {}]
  %s6 = inlined_call_operand.vmem [shape: f32[4,36], index: 6, kind: input, shape index: {}]
  %s7 = inlined_call_operand.vmem [shape: f32[4,1], index: 7, kind: input, shape index: {}]
  %s8 = inlined_call_operand.vmem [shape: f32[4,1], index: 8, kind: input, shape index: {}]
  %s9 = inlined_call_operand.hbm [shape: f32[2,4,1024], index: 9, kind: output, shape index: {}]
  %s10 = sld [smem:[#allocation0]]
  $region73: #{tpu_custom_call.1} parent=0
    _
  %s12 = ssub.s32 1, %s10
  %s13 = scalar_select 0, %s12, %s10
  $region1: #{tpu_custom_call.1} parent=0
    #allocation2 [shape = 'u8[32768]{0}', space=vmem, size = 0x8000, scoped, tag = 'input window, operand 2']
    #allocation3 [shape = 's32[2]{0}', space=sflag, size = 0x8, scoped, tag = 'scoped memory for tpu_custom_call.1']
    #allocation4 [shape = 's32[2]{0}', space=sflag, size = 0x8, scoped, tag = 'scoped memory for tpu_custom_call.1']
    #allocation5 [shape = 'u8[32768]{0}', space=vmem, size = 0x8000, scoped, tag = 'output window, operand 0']
    %14 = vsyncpa [#allocation3], 0
    %s15 = scalar_lea.sflag [#allocation3], 1
    %16 = vsyncpa %s15, 0
    %17 = vsyncpa [#allocation4], 0
    %s18 = scalar_lea.sflag [#allocation4], 1
    %19 = vsyncpa %s18, 0
    loop: start=0, step=1, limit=4
    $region2: #{tpu_custom_call.1} parent=1 // loop_pre_header
      _
    $region3: #{tpu_custom_call.1} parent=1 // loop_header
      %s21 = sphi 0, %s25
      %p22 = scmp.ge.s32.totalorder %s21, 4
      %s29 = sphi 0, %s29
      %s31 = sphi 0, %s29
      %s32 = sphi 0, %s31
      %s46 = sphi 0, %s32
      %s50 = sphi 0, %s50
      %s52 = sphi 0, %s50
      %s53 = sphi 0, %s52
      %s67 = sphi 0, %s53
      %s73 = sphi 0, %s75
      %s76 = sphi 0, %s73
      %s77 = sphi 0, %s76
      %s93 = sphi 0, %s77
      %s97 = sphi 0, %s97
      %s99 = sphi 0, %s97
      %s100 = sphi 0, %s99
      %s114 = sphi 0, %s100
      %s118 = sphi 0, %s118
      %s120 = sphi 0, %s118
      %s121 = sphi 0, %s120
      %s135 = sphi 0, %s121
      %s139 = sphi 0, %s139
      %s141 = sphi 0, %s139
      %s142 = sphi 0, %s141
      %s156 = sphi 0, %s142
      %s160 = sphi 0, %s160
      %s162 = sphi 0, %s160
      %s163 = sphi 0, %s162
      %s177 = sphi 0, %s163
      %s181 = sphi 0, %s181
      %s183 = sphi 0, %s181
      %s184 = sphi 0, %s183
      %s198 = sphi 0, %s184
      %s202 = sphi 0, %s202
      %s204 = sphi 0, %s202
      %s205 = sphi 0, %s204
      %s219 = sphi 0, %s205
      %s225 = sphi 0, %s227
      %s228 = sphi 0, %s225
      %s229 = sphi 0, %s228
      %s245 = sphi 0, %s229
    $region4: #{tpu_custom_call.1} parent=1 // loop_header_branch
      %24 = sbr.rel (%p22) target = $region8
    $region5: #{tpu_custom_call.1} parent=1 // loop_body
      %s26 = ssub.s32 %s21, 1
      %s27 = ssub.s32 %s21, 2
      %s28 = sadd.s32 %s21, 1
      %s30 = sadd.s32 %s29, 1
      %p33 = scmp.eq.s32.totalorder %s21, 1
      %p34 = scmp.ne.s32.totalorder %s29, %s31
      %p35 = scmp.eq.s32.totalorder %s21, 0
      %p36 = por %p34, %p35
      %p37 = scmp.ne.s32.totalorder %s29, %s31
      %p38 = scmp.eq.s32.totalorder %s26, 1
      %p39 = por %p37, %p38
      %p40 = scmp.ne.s32.totalorder %s31, %s32
      %p41 = scmp.eq.s32.totalorder %s26, 0
      %p42 = por %p40, %p41
      %p43 = scmp.ne.s32.totalorder %s31, %s32
      %p44 = scmp.eq.s32.totalorder %s27, 1
      %p45 = por %p43, %p44
      %p47 = scmp.ne.s32.totalorder %s32, %s46
      %p48 = scmp.eq.s32.totalorder %s27, 0
      %p49 = por %p47, %p48
      %s51 = sadd.s32 %s50, 1
      %p54 = scmp.eq.s32.totalorder %s21, 1
      %p55 = scmp.ne.s32.totalorder %s50, %s52
      %p56 = scmp.eq.s32.totalorder %s21, 0
      %p57 = por %p55, %p56
      %p58 = scmp.ne.s32.totalorder %s50, %s52
      %p59 = scmp.eq.s32.totalorder %s26, 1
      %p60 = por %p58, %p59
      %p61 = scmp.ne.s32.totalorder %s52, %s53
      %p62 = scmp.eq.s32.totalorder %s26, 0
      %p63 = por %p61, %p62
      %p64 = scmp.ne.s32.totalorder %s52, %s53
      %p65 = scmp.eq.s32.totalorder %s27, 1
      %p66 = por %p64, %p65
      %p68 = scmp.ne.s32.totalorder %s53, %s67
      %p69 = scmp.eq.s32.totalorder %s27, 0
      %p70 = por %p68, %p69
      %s71 = ssub.s32 %s21, %s28
      %p72 = scmp.eq.s32.totalorder %s71, 0
      %s74 = sadd.s32 %s73, 1
      %s75 = scalar_select %p72, %s73, %s74
      %p78 = pneg %p72
      %p79 = scmp.eq.s32.totalorder %s21, 1
      %p80 = por %p78, %p79
      %p81 = scmp.ne.s32.totalorder %s73, %s76
      %p82 = scmp.eq.s32.totalorder %s21, 0
      %p83 = por %p81, %p82
      %p84 = scmp.ne.s32.totalorder %s73, %s76
      %p85 = scmp.eq.s32.totalorder %s26, 1
      %p86 = por %p84, %p85
      %p87 = scmp.ne.s32.totalorder %s76, %s77
      %p88 = scmp.eq.s32.totalorder %s26, 0
      %p89 = por %p87, %p88
      %p90 = scmp.ne.s32.totalorder %s76, %s77
      %p91 = scmp.eq.s32.totalorder %s27, 1
      %p92 = por %p90, %p91
      %p94 = scmp.ne.s32.totalorder %s77, %s93
      %p95 = scmp.eq.s32.totalorder %s27, 0
      %p96 = por %p94, %p95
      %s98 = sadd.s32 %s97, 1
      %p101 = scmp.eq.s32.totalorder %s21, 1
      %p102 = scmp.ne.s32.totalorder %s97, %s99
      %p103 = scmp.eq.s32.totalorder %s21, 0
      %p104 = por %p102, %p103
      %p105 = scmp.ne.s32.totalorder %s97, %s99
      %p106 = scmp.eq.s32.totalorder %s26, 1
      %p107 = por %p105, %p106
      %p108 = scmp.ne.s32.totalorder %s99, %s100
      %p109 = scmp.eq.s32.totalorder %s26, 0
      %p110 = por %p108, %p109
      %p111 = scmp.ne.s32.totalorder %s99, %s100
      %p112 = scmp.eq.s32.totalorder %s27, 1
      %p113 = por %p111, %p112
      %p115 = scmp.ne.s32.totalorder %s100, %s114
      %p116 = scmp.eq.s32.totalorder %s27, 0
      %p117 = por %p115, %p116
      %s119 = sadd.s32 %s118, 1
      %p122 = scmp.eq.s32.totalorder %s21, 1
      %p123 = scmp.ne.s32.totalorder %s118, %s120
      %p124 = scmp.eq.s32.totalorder %s21, 0
      %p125 = por %p123, %p124
      %p126 = scmp.ne.s32.totalorder %s118, %s120
      %p127 = scmp.eq.s32.totalorder %s26, 1
      %p128 = por %p126, %p127
      %p129 = scmp.ne.s32.totalorder %s120, %s121
      %p130 = scmp.eq.s32.totalorder %s26, 0
      %p131 = por %p129, %p130
      %p132 = scmp.ne.s32.totalorder %s120, %s121
      %p133 = scmp.eq.s32.totalorder %s27, 1
      %p134 = por %p132, %p133
      %p136 = scmp.ne.s32.totalorder %s121, %s135
      %p137 = scmp.eq.s32.totalorder %s27, 0
      %p138 = por %p136, %p137
      %s140 = sadd.s32 %s139, 1
      %p143 = scmp.eq.s32.totalorder %s21, 1
      %p144 = scmp.ne.s32.totalorder %s139, %s141
      %p145 = scmp.eq.s32.totalorder %s21, 0
      %p146 = por %p144, %p145
      %p147 = scmp.ne.s32.totalorder %s139, %s141
      %p148 = scmp.eq.s32.totalorder %s26, 1
      %p149 = por %p147, %p148
      %p150 = scmp.ne.s32.totalorder %s141, %s142
      %p151 = scmp.eq.s32.totalorder %s26, 0
      %p152 = por %p150, %p151
      %p153 = scmp.ne.s32.totalorder %s141, %s142
      %p154 = scmp.eq.s32.totalorder %s27, 1
      %p155 = por %p153, %p154
      %p157 = scmp.ne.s32.totalorder %s142, %s156
      %p158 = scmp.eq.s32.totalorder %s27, 0
      %p159 = por %p157, %p158
      %s161 = sadd.s32 %s160, 1
      %p164 = scmp.eq.s32.totalorder %s21, 1
      %p165 = scmp.ne.s32.totalorder %s160, %s162
      %p166 = scmp.eq.s32.totalorder %s21, 0
      %p167 = por %p165, %p166
      %p168 = scmp.ne.s32.totalorder %s160, %s162
      %p169 = scmp.eq.s32.totalorder %s26, 1
      %p170 = por %p168, %p169
      %p171 = scmp.ne.s32.totalorder %s162, %s163
      %p172 = scmp.eq.s32.totalorder %s26, 0
      %p173 = por %p171, %p172
      %p174 = scmp.ne.s32.totalorder %s162, %s163
      %p175 = scmp.eq.s32.totalorder %s27, 1
      %p176 = por %p174, %p175
      %p178 = scmp.ne.s32.totalorder %s163, %s177
      %p179 = scmp.eq.s32.totalorder %s27, 0
      %p180 = por %p178, %p179
      %s182 = sadd.s32 %s181, 1
      %p185 = scmp.eq.s32.totalorder %s21, 1
      %p186 = scmp.ne.s32.totalorder %s181, %s183
      %p187 = scmp.eq.s32.totalorder %s21, 0
      %p188 = por %p186, %p187
      %p189 = scmp.ne.s32.totalorder %s181, %s183
      %p190 = scmp.eq.s32.totalorder %s26, 1
      %p191 = por %p189, %p190
      %p192 = scmp.ne.s32.totalorder %s183, %s184
      %p193 = scmp.eq.s32.totalorder %s26, 0
      %p194 = por %p192, %p193
      %p195 = scmp.ne.s32.totalorder %s183, %s184
      %p196 = scmp.eq.s32.totalorder %s27, 1
      %p197 = por %p195, %p196
      %p199 = scmp.ne.s32.totalorder %s184, %s198
      %p200 = scmp.eq.s32.totalorder %s27, 0
      %p201 = por %p199, %p200
      %s203 = sadd.s32 %s202, 1
      %p206 = scmp.eq.s32.totalorder %s21, 1
      %p207 = scmp.ne.s32.totalorder %s202, %s204
      %p208 = scmp.eq.s32.totalorder %s21, 0
      %p209 = por %p207, %p208
      %p210 = scmp.ne.s32.totalorder %s202, %s204
      %p211 = scmp.eq.s32.totalorder %s26, 1
      %p212 = por %p210, %p211
      %p213 = scmp.ne.s32.totalorder %s204, %s205
      %p214 = scmp.eq.s32.totalorder %s26, 0
      %p215 = por %p213, %p214
      %p216 = scmp.ne.s32.totalorder %s204, %s205
      %p217 = scmp.eq.s32.totalorder %s27, 1
      %p218 = por %p216, %p217
      %p220 = scmp.ne.s32.totalorder %s205, %s219
      %p221 = scmp.eq.s32.totalorder %s27, 0
      %p222 = por %p220, %p221
      %s223 = ssub.s32 %s21, %s28
      %p224 = scmp.eq.s32.totalorder %s223, 0
      %s226 = sadd.s32 %s225, 1
      %s227 = scalar_select %p224, %s225, %s226
      %p230 = pneg %p224
      %p231 = scmp.eq.s32.totalorder %s21, 1
      %p232 = por %p230, %p231
      %p233 = scmp.ne.s32.totalorder %s225, %s228
      %p234 = scmp.eq.s32.totalorder %s21, 0
      %p235 = por %p233, %p234
      %p236 = scmp.ne.s32.totalorder %s225, %s228
      %p237 = scmp.eq.s32.totalorder %s26, 1
      %p238 = por %p236, %p237
      %p239 = scmp.ne.s32.totalorder %s228, %s229
      %p240 = scmp.eq.s32.totalorder %s26, 0
      %p241 = por %p239, %p240
      %p242 = scmp.ne.s32.totalorder %s228, %s229
      %p243 = scmp.eq.s32.totalorder %s27, 1
      %p244 = por %p242, %p243
      %p246 = scmp.ne.s32.totalorder %s229, %s245
      %p247 = scmp.eq.s32.totalorder %s27, 0
      %p248 = por %p246, %p247
      %p249 = scmp.le.s32.totalorder 1, %s21
      %p250 = scmp.lt.s32.totalorder %s21, 3
      %p251 = pnand %p249, %p250
      %p252 = pneg %p251
      // Predicated region
      $region9: #{tpu_custom_call.1} parent=5 // pred_check
        _
      $region10: #{tpu_custom_call.1} parent=5 // pred_check_branch
        %254 = sbr.rel (%p251) target = $region12
      $region11: #{tpu_custom_call.1} parent=5 // pred_region
        %s255 = ssub.s32 %s21, 1
        // Predicated region
        $region13: #{tpu_custom_call.1} parent=11 // pred_check
          %p256 = pneg %p42
        $region14: #{tpu_custom_call.1} parent=11 // pred_check_branch
          %258 = sbr.rel (%p256) target = $region16
        $region15: #{tpu_custom_call.1} parent=11 // pred_region
          _
        $region16: #{tpu_custom_call.1} parent=11 // pred_fallthru
          _
        // Predicated region
        $region17: #{tpu_custom_call.1} parent=11 // pred_check
          %p259 = pneg %p63
        $region18: #{tpu_custom_call.1} parent=11 // pred_check_branch
          %261 = sbr.rel (%p259) target = $region20
        $region19: #{tpu_custom_call.1} parent=11 // pred_region
          _
        $region20: #{tpu_custom_call.1} parent=11 // pred_fallthru
          _
        // Predicated region
        $region21: #{tpu_custom_call.1} parent=11 // pred_check
          %p262 = pneg %p110
        $region22: #{tpu_custom_call.1} parent=11 // pred_check_branch
          %264 = sbr.rel (%p262) target = $region24
        $region23: #{tpu_custom_call.1} parent=11 // pred_region
          _
        $region24: #{tpu_custom_call.1} parent=11 // pred_fallthru
          _
        // Predicated region
        $region25: #{tpu_custom_call.1} parent=11 // pred_check
          %p265 = pneg %p131
        $region26: #{tpu_custom_call.1} parent=11 // pred_check_branch
          %267 = sbr.rel (%p265) target = $region28
        $region27: #{tpu_custom_call.1} parent=11 // pred_region
          _
        $region28: #{tpu_custom_call.1} parent=11 // pred_fallthru
          _
        // Predicated region
        $region29: #{tpu_custom_call.1} parent=11 // pred_check
          %p268 = pneg %p152
        $region30: #{tpu_custom_call.1} parent=11 // pred_check_branch
          %270 = sbr.rel (%p268) target = $region32
        $region31: #{tpu_custom_call.1} parent=11 // pred_region
          _
        $region32: #{tpu_custom_call.1} parent=11 // pred_fallthru
          _
        // Predicated region
        $region33: #{tpu_custom_call.1} parent=11 // pred_check
          %p271 = pneg %p173
        $region34: #{tpu_custom_call.1} parent=11 // pred_check_branch
          %273 = sbr.rel (%p271) target = $region36
        $region35: #{tpu_custom_call.1} parent=11 // pred_region
          _
        $region36: #{tpu_custom_call.1} parent=11 // pred_fallthru
          _
        // Predicated region
        $region37: #{tpu_custom_call.1} parent=11 // pred_check
          %p274 = pneg %p194
        $region38: #{tpu_custom_call.1} parent=11 // pred_check_branch
          %276 = sbr.rel (%p274) target = $region40
        $region39: #{tpu_custom_call.1} parent=11 // pred_region
          _
        $region40: #{tpu_custom_call.1} parent=11 // pred_fallthru
          _
        // Predicated region
        $region41: #{tpu_custom_call.1} parent=11 // pred_check
          %p277 = pneg %p215
        $region42: #{tpu_custom_call.1} parent=11 // pred_check_branch
          %279 = sbr.rel (%p277) target = $region44
        $region43: #{tpu_custom_call.1} parent=11 // pred_region
          _
        $region44: #{tpu_custom_call.1} parent=11 // pred_fallthru
          _
      $region12: #{tpu_custom_call.1} parent=5 // pred_fallthru
        _
      %p280 = scmp.lt.s32.totalorder %s21, 2
      // Predicated region
      $region45: #{tpu_custom_call.1} parent=5 // pred_check
        %p281 = pneg %p280
      $region46: #{tpu_custom_call.1} parent=5 // pred_check_branch
        %283 = sbr.rel (%p281) target = $region48
      $region47: #{tpu_custom_call.1} parent=5 // pred_region
        // Predicated region
        $region49: #{tpu_custom_call.1} parent=47 // pred_check
          %p284 = pneg %p83
        $region50: #{tpu_custom_call.1} parent=47 // pred_check_branch
          %286 = sbr.rel (%p284) target = $region52
        $region51: #{tpu_custom_call.1} parent=47 // pred_region
          %s287 = sand.u32 %s73, 1
          %s288 = scalar_lea.sflag [#allocation3], %s287
          %s289 = sand.u32 %s73, 1
          %s290 = smul.addr %s289, 32
          %s291 = scalar_lea.vmem [#allocation2], %s290
          %s293 = ssub.s32 512, 512
          %294 = vsyncadd %s288, %s293
          %s295 = smul.addr %s21, 8
          %s296 = smul.addr %s295, 64
          %s297 = scalar_lea.hbm %s2, %s296
          %s299 = sshll.u32 %s291, 4
          %s300 = int_to_ptr.vmem [resolvable:$true] %s299
          %302 = dma.hbm_to_vmem [thread:$0]  %s297, 512, %s300, %s288
        $region52: #{tpu_custom_call.1} parent=47 // pred_fallthru
          _
      $region48: #{tpu_custom_call.1} parent=5 // pred_fallthru
        _
      %p303 = scmp.le.s32.totalorder 1, %s21
      %p304 = scmp.lt.s32.totalorder %s21, 3
      %p305 = pnand %p303, %p304
      %p306 = pneg %p305
      // Predicated region
      $region53: #{tpu_custom_call.1} parent=5 // pred_check
        _
      $region54: #{tpu_custom_call.1} parent=5 // pred_check_branch
        %308 = sbr.rel (%p305) target = $region56
      $region55: #{tpu_custom_call.1} parent=5 // pred_region
        %s309 = ssub.s32 %s21, 1
        %s310 = sand.u32 %s76, 1
        %s311 = scalar_lea.sflag [#allocation3], %s310
        %s312 = sand.u32 %s76, 1
        %s313 = smul.addr %s312, 32
        %s314 = scalar_lea.vmem [#allocation2], %s313
        // Predicated region
        $region57: #{tpu_custom_call.1} parent=55 // pred_check
          %p315 = pneg %p89
        $region58: #{tpu_custom_call.1} parent=55 // pred_check_branch
          %317 = sbr.rel (%p315) target = $region60
        $region59: #{tpu_custom_call.1} parent=55 // pred_region
          %318 = dma.done %s311, 512
        $region60: #{tpu_custom_call.1} parent=55 // pred_fallthru
          _
        %p319 = pneg %p42
        %p320 = pneg %p39
        %p321 = pneg %p63
        %p322 = pneg %p60
        %s323 = sand.u32 %s76, 1
        %s324 = scalar_lea.sflag [#allocation3], %s323
        %s325 = sand.u32 %s76, 1
        %s326 = smul.addr %s325, 32
        %s327 = scalar_lea.vmem [#allocation2], %s326
        %p328 = pneg %p89
        %p329 = pneg %p86
        %p330 = pneg %p110
        %p331 = pneg %p107
        %p332 = pneg %p131
        %p333 = pneg %p128
        %p334 = pneg %p152
        %p335 = pneg %p149
        %p336 = pneg %p173
        %p337 = pneg %p170
        %p338 = pneg %p194
        %p339 = pneg %p191
        %p340 = pneg %p215
        %p341 = pneg %p212
        %p342 = pneg %p241
        %p343 = pneg %p238
        %s344 = sand.u32 %s228, 1
        %s345 = scalar_lea.sflag [#allocation4], %s344
        %s346 = sand.u32 %s228, 1
        %s347 = smul.addr %s346, 32
        %s348 = scalar_lea.vmem [#allocation5], %s347
        %v349 = vld [vmem:[%s314] sm:$0xff]
        %v350 = vld [vmem:[%s314 + $0x8] sm:$0xff]
        %v351 = vld [vmem:[%s314 + $0x10] sm:$0xff]
        %v352 = vld [vmem:[%s314 + $0x18] sm:$0xff]
        %v353 = vld [vmem:[%s3] sm:$0xf]
        %v354 = vld [vmem:[%s6] sm:$0xf]
        %v355 = vld [vmem:[%s4] sm:$0xf]
        %v356 = vld [vmem:[%s5] sm:$0xf]
        %v357 = vld [vmem:[%s7] sm:$0xf]
        %v358 = vld [vmem:[%s8] sm:$0xf]
        %v359 = vld [vmem:[%s0] sm:$0xff]
        %v360 = vld [vmem:[%s1] sm:$0xff]
        %vm361 = vcmp.ge.s32.totalorder %v360, 16
        %vm362 = vcmp.ge.s32.totalorder %v359, 1
        %vm363 = vmand %vm361, %vm362
        %vm364 = vcmp.le.s32.totalorder %v359, 14
        %vm365 = vmand %vm361, %vm364
        %vm366 = vcmp.lt.s32.totalorder %v360, 240
        %vm367 = vmand %vm366, %vm362
        %vm368 = vmand %vm366, %vm364
        %v373 = vcombine.high %v349, %v349
        %v374 = vcombine.high %v350, %v350
        %v375 = vcombine.high %v351, %v351
        %v376 = vcombine.high %v352, %v352
        %381 = vrot.lane.b32.xlu0 %v349, 17
        %v382 = vpop.permute.xlu0 %381
        %383 = vrot.lane.b32.xlu0 %v373, 17
        %v384 = vpop.permute.xlu0 %383
        %385 = vrot.lane.b32.xlu0 %v350, 17
        %v386 = vpop.permute.xlu0 %385
        %387 = vrot.lane.b32.xlu0 %v374, 17
        %v388 = vpop.permute.xlu0 %387
        %389 = vrot.lane.b32.xlu0 %v351, 17
        %v390 = vpop.permute.xlu0 %389
        %391 = vrot.lane.b32.xlu0 %v375, 17
        %v392 = vpop.permute.xlu0 %391
        %393 = vrot.lane.b32.xlu0 %v352, 17
        %v394 = vpop.permute.xlu0 %393
        %395 = vrot.lane.b32.xlu0 %v376, 17
        %v396 = vpop.permute.xlu0 %395
        %v397 = vlaneseq
        %v398 = vand.u32 %v397, 127
        %vm399 = vcmp.lt.s32.totalorder %v398, 17
        %v400 = vsel %vm399, %v394, %v396
        %v401 = vsel %vm399, %v392, %v394
        %v402 = vsel %vm399, %v390, %v392
        %v403 = vsel %vm399, %v388, %v390
        %v404 = vsel %vm399, %v386, %v388
        %v405 = vsel %vm399, %v384, %v386
        %v406 = vsel %vm399, %v382, %v384
        %v407 = vsel %vm399, %v396, %v382
        %v408 = vsel %vm363, 1, 0
        %v409 = vlaneseq
        %v410 = vshrl.u32 %v409, 7
        %v411 = vsub.s32 0, %v410
        %v412 = vrot.slane %v408, %v411
        %v413 = vlaneseq
        %v414 = vshrl.u32 %v413, 7
        %v415 = vsub.s32 1, %v414
        %v416 = vrot.slane %v408, %v415
        %v417 = vlaneseq
        %v418 = vshrl.u32 %v417, 7
        %v419 = vsub.s32 2, %v418
        %v420 = vrot.slane %v408, %v419
        %v421 = vlaneseq
        %v422 = vshrl.u32 %v421, 7
        %v423 = vsub.s32 3, %v422
        %v424 = vrot.slane %v408, %v423
        %v425 = vlaneseq
        %v426 = vshrl.u32 %v425, 7
        %v427 = vsub.s32 4, %v426
        %v428 = vrot.slane %v408, %v427
        %v429 = vlaneseq
        %v430 = vshrl.u32 %v429, 7
        %v431 = vsub.s32 5, %v430
        %v432 = vrot.slane %v408, %v431
        %v433 = vlaneseq
        %v434 = vshrl.u32 %v433, 7
        %v435 = vsub.s32 6, %v434
        %v436 = vrot.slane %v408, %v435
        %v437 = vlaneseq
        %v438 = vshrl.u32 %v437, 7
        %v439 = vsub.s32 7, %v438
        %v440 = vrot.slane %v408, %v439
        %vm441 = vcmp.eq.s32.totalorder %v412, 1
        %vm442 = vcmp.eq.s32.totalorder %v416, 1
        %vm443 = vcmp.eq.s32.totalorder %v420, 1
        %vm444 = vcmp.eq.s32.totalorder %v424, 1
        %vm445 = vcmp.eq.s32.totalorder %v428, 1
        %vm446 = vcmp.eq.s32.totalorder %v432, 1
        %vm447 = vcmp.eq.s32.totalorder %v436, 1
        %vm448 = vcmp.eq.s32.totalorder %v440, 1
        %v449 = vsel %vm441, %v407, 0.0
        %v450 = vsel %vm442, %v406, 0.0
        %v451 = vsel %vm443, %v405, 0.0
        %v452 = vsel %vm444, %v404, 0.0
        %v453 = vsel %vm445, %v403, 0.0
        %v454 = vsel %vm446, %v402, 0.0
        %v455 = vsel %vm447, %v401, 0.0
        %v456 = vsel %vm448, %v400, 0.0
        %457 = vrot.lane.b32.xlu0 %v349, 16
        %v458 = vpop.permute.xlu0 %457
        %459 = vrot.lane.b32.xlu0 %v373, 16
        %v460 = vpop.permute.xlu0 %459
        %461 = vrot.lane.b32.xlu0 %v350, 16
        %v462 = vpop.permute.xlu0 %461
        %463 = vrot.lane.b32.xlu0 %v374, 16
        %v464 = vpop.permute.xlu0 %463
        %465 = vrot.lane.b32.xlu0 %v351, 16
        %v466 = vpop.permute.xlu0 %465
        %467 = vrot.lane.b32.xlu0 %v375, 16
        %v468 = vpop.permute.xlu0 %467
        %469 = vrot.lane.b32.xlu0 %v352, 16
        %v470 = vpop.permute.xlu0 %469
        %471 = vrot.lane.b32.xlu0 %v376, 16
        %v472 = vpop.permute.xlu0 %471
        %vm473 = vcmp.lt.s32.totalorder %v398, 16
        %v474 = vsel %vm473, %v470, %v472
        %v475 = vsel %vm473, %v468, %v470
        %v476 = vsel %vm473, %v466, %v468
        %v477 = vsel %vm473, %v464, %v466
        %v478 = vsel %vm473, %v462, %v464
        %v479 = vsel %vm473, %v460, %v462
        %v480 = vsel %vm473, %v458, %v460
        %v481 = vsel %vm473, %v472, %v458
        %v482 = vsel %vm361, 1, 0
        %v483 = vlaneseq
        %v484 = vshrl.u32 %v483, 7
        %v485 = vsub.s32 0, %v484
        %v486 = vrot.slane %v482, %v485
        %v487 = vlaneseq
        %v488 = vshrl.u32 %v487, 7
        %v489 = vsub.s32 1, %v488
        %v490 = vrot.slane %v482, %v489
        %v491 = vlaneseq
        %v492 = vshrl.u32 %v491, 7
        %v493 = vsub.s32 2, %v492
        %v494 = vrot.slane %v482, %v493
        %v495 = vlaneseq
        %v496 = vshrl.u32 %v495, 7
        %v497 = vsub.s32 3, %v496
        %v498 = vrot.slane %v482, %v497
        %v499 = vlaneseq
        %v500 = vshrl.u32 %v499, 7
        %v501 = vsub.s32 4, %v500
        %v502 = vrot.slane %v482, %v501
        %v503 = vlaneseq
        %v504 = vshrl.u32 %v503, 7
        %v505 = vsub.s32 5, %v504
        %v506 = vrot.slane %v482, %v505
        %v507 = vlaneseq
        %v508 = vshrl.u32 %v507, 7
        %v509 = vsub.s32 6, %v508
        %v510 = vrot.slane %v482, %v509
        %v511 = vlaneseq
        %v512 = vshrl.u32 %v511, 7
        %v513 = vsub.s32 7, %v512
        %v514 = vrot.slane %v482, %v513
        %vm515 = vcmp.eq.s32.totalorder %v486, 1
        %vm516 = vcmp.eq.s32.totalorder %v490, 1
        %vm517 = vcmp.eq.s32.totalorder %v494, 1
        %vm518 = vcmp.eq.s32.totalorder %v498, 1
        %vm519 = vcmp.eq.s32.totalorder %v502, 1
        %vm520 = vcmp.eq.s32.totalorder %v506, 1
        %vm521 = vcmp.eq.s32.totalorder %v510, 1
        %vm522 = vcmp.eq.s32.totalorder %v514, 1
        %v523 = vsel %vm515, %v481, 0.0
        %v524 = vsel %vm516, %v480, 0.0
        %v525 = vsel %vm517, %v479, 0.0
        %v526 = vsel %vm518, %v478, 0.0
        %v527 = vsel %vm519, %v477, 0.0
        %v528 = vsel %vm520, %v476, 0.0
        %v529 = vsel %vm521, %v475, 0.0
        %v530 = vsel %vm522, %v474, 0.0
        %531 = vrot.lane.b32.xlu0 %v349, 15
        %v532 = vpop.permute.xlu0 %531
        %533 = vrot.lane.b32.xlu0 %v373, 15
        %v534 = vpop.permute.xlu0 %533
        %535 = vrot.lane.b32.xlu0 %v350, 15
        %v536 = vpop.permute.xlu0 %535
        %537 = vrot.lane.b32.xlu0 %v374, 15
        %v538 = vpop.permute.xlu0 %537
        %539 = vrot.lane.b32.xlu0 %v351, 15
        %v540 = vpop.permute.xlu0 %539
        %541 = vrot.lane.b32.xlu0 %v375, 15
        %v542 = vpop.permute.xlu0 %541
        %543 = vrot.lane.b32.xlu0 %v352, 15
        %v544 = vpop.permute.xlu0 %543
        %545 = vrot.lane.b32.xlu0 %v376, 15
        %v546 = vpop.permute.xlu0 %545
        %vm547 = vcmp.lt.s32.totalorder %v398, 15
        %v548 = vsel %vm547, %v544, %v546
        %v549 = vsel %vm547, %v542, %v544
        %v550 = vsel %vm547, %v540, %v542
        %v551 = vsel %vm547, %v538, %v540
        %v552 = vsel %vm547, %v536, %v538
        %v553 = vsel %vm547, %v534, %v536
        %v554 = vsel %vm547, %v532, %v534
        %v555 = vsel %vm547, %v546, %v532
        %v556 = vsel %vm365, 1, 0
        %v557 = vlaneseq
        %v558 = vshrl.u32 %v557, 7
        %v559 = vsub.s32 0, %v558
        %v560 = vrot.slane %v556, %v559
        %v561 = vlaneseq
        %v562 = vshrl.u32 %v561, 7
        %v563 = vsub.s32 1, %v562
        %v564 = vrot.slane %v556, %v563
        %v565 = vlaneseq
        %v566 = vshrl.u32 %v565, 7
        %v567 = vsub.s32 2, %v566
        %v568 = vrot.slane %v556, %v567
        %v569 = vlaneseq
        %v570 = vshrl.u32 %v569, 7
        %v571 = vsub.s32 3, %v570
        %v572 = vrot.slane %v556, %v571
        %v573 = vlaneseq
        %v574 = vshrl.u32 %v573, 7
        %v575 = vsub.s32 4, %v574
        %v576 = vrot.slane %v556, %v575
        %v577 = vlaneseq
        %v578 = vshrl.u32 %v577, 7
        %v579 = vsub.s32 5, %v578
        %v580 = vrot.slane %v556, %v579
        %v581 = vlaneseq
        %v582 = vshrl.u32 %v581, 7
        %v583 = vsub.s32 6, %v582
        %v584 = vrot.slane %v556, %v583
        %v585 = vlaneseq
        %v586 = vshrl.u32 %v585, 7
        %v587 = vsub.s32 7, %v586
        %v588 = vrot.slane %v556, %v587
        %vm589 = vcmp.eq.s32.totalorder %v560, 1
        %vm590 = vcmp.eq.s32.totalorder %v564, 1
        %vm591 = vcmp.eq.s32.totalorder %v568, 1
        %vm592 = vcmp.eq.s32.totalorder %v572, 1
        %vm593 = vcmp.eq.s32.totalorder %v576, 1
        %vm594 = vcmp.eq.s32.totalorder %v580, 1
        %vm595 = vcmp.eq.s32.totalorder %v584, 1
        %vm596 = vcmp.eq.s32.totalorder %v588, 1
        %v597 = vsel %vm589, %v555, 0.0
        %v598 = vsel %vm590, %v554, 0.0
        %v599 = vsel %vm591, %v553, 0.0
        %v600 = vsel %vm592, %v552, 0.0
        %v601 = vsel %vm593, %v551, 0.0
        %v602 = vsel %vm594, %v550, 0.0
        %v603 = vsel %vm595, %v549, 0.0
        %v604 = vsel %vm596, %v548, 0.0
        %605 = vrot.lane.b32.xlu0 %v349, 1
        %v606 = vpop.permute.xlu0 %605
        %607 = vrot.lane.b32.xlu0 %v373, 1
        %v608 = vpop.permute.xlu0 %607
        %609 = vrot.lane.b32.xlu0 %v350, 1
        %v610 = vpop.permute.xlu0 %609
        %611 = vrot.lane.b32.xlu0 %v374, 1
        %v612 = vpop.permute.xlu0 %611
        %613 = vrot.lane.b32.xlu0 %v351, 1
        %v614 = vpop.permute.xlu0 %613
        %615 = vrot.lane.b32.xlu0 %v375, 1
        %v616 = vpop.permute.xlu0 %615
        %617 = vrot.lane.b32.xlu0 %v352, 1
        %v618 = vpop.permute.xlu0 %617
        %619 = vrot.lane.b32.xlu0 %v376, 1
        %v620 = vpop.permute.xlu0 %619
        %vm621 = vcmp.lt.s32.totalorder %v398, 1
        %v622 = vsel %vm621, %v618, %v620
        %v623 = vsel %vm621, %v616, %v618
        %v624 = vsel %vm621, %v614, %v616
        %v625 = vsel %vm621, %v612, %v614
        %v626 = vsel %vm621, %v610, %v612
        %v627 = vsel %vm621, %v608, %v610
        %v628 = vsel %vm621, %v606, %v608
        %v629 = vsel %vm621, %v620, %v606
        %v630 = vsel %vm362, 1, 0
        %v631 = vlaneseq
        %v632 = vshrl.u32 %v631, 7
        %v633 = vsub.s32 0, %v632
        %v634 = vrot.slane %v630, %v633
        %v635 = vlaneseq
        %v636 = vshrl.u32 %v635, 7
        %v637 = vsub.s32 1, %v636
        %v638 = vrot.slane %v630, %v637
        %v639 = vlaneseq
        %v640 = vshrl.u32 %v639, 7
        %v641 = vsub.s32 2, %v640
        %v642 = vrot.slane %v630, %v641
        %v643 = vlaneseq
        %v644 = vshrl.u32 %v643, 7
        %v645 = vsub.s32 3, %v644
        %v646 = vrot.slane %v630, %v645
        %v647 = vlaneseq
        %v648 = vshrl.u32 %v647, 7
        %v649 = vsub.s32 4, %v648
        %v650 = vrot.slane %v630, %v649
        %v651 = vlaneseq
        %v652 = vshrl.u32 %v651, 7
        %v653 = vsub.s32 5, %v652
        %v654 = vrot.slane %v630, %v653
        %v655 = vlaneseq
        %v656 = vshrl.u32 %v655, 7
        %v657 = vsub.s32 6, %v656
        %v658 = vrot.slane %v630, %v657
        %v659 = vlaneseq
        %v660 = vshrl.u32 %v659, 7
        %v661 = vsub.s32 7, %v660
        %v662 = vrot.slane %v630, %v661
        %vm663 = vcmp.eq.s32.totalorder %v634, 1
        %vm664 = vcmp.eq.s32.totalorder %v638, 1
        %vm665 = vcmp.eq.s32.totalorder %v642, 1
        %vm666 = vcmp.eq.s32.totalorder %v646, 1
        %vm667 = vcmp.eq.s32.totalorder %v650, 1
        %vm668 = vcmp.eq.s32.totalorder %v654, 1
        %vm669 = vcmp.eq.s32.totalorder %v658, 1
        %vm670 = vcmp.eq.s32.totalorder %v662, 1
        %v671 = vsel %vm663, %v629, 0.0
        %v672 = vsel %vm664, %v628, 0.0
        %v673 = vsel %vm665, %v627, 0.0
        %v674 = vsel %vm666, %v626, 0.0
        %v675 = vsel %vm667, %v625, 0.0
        %v676 = vsel %vm668, %v624, 0.0
        %v677 = vsel %vm669, %v623, 0.0
        %v678 = vsel %vm670, %v622, 0.0
        %679 = vrot.lane.b32.xlu0 %v349, 127
        %v680 = vpop.permute.xlu0 %679
        %681 = vrot.lane.b32.xlu0 %v373, 127
        %v682 = vpop.permute.xlu0 %681
        %683 = vrot.lane.b32.xlu0 %v350, 127
        %v684 = vpop.permute.xlu0 %683
        %685 = vrot.lane.b32.xlu0 %v374, 127
        %v686 = vpop.permute.xlu0 %685
        %687 = vrot.lane.b32.xlu0 %v351, 127
        %v688 = vpop.permute.xlu0 %687
        %689 = vrot.lane.b32.xlu0 %v375, 127
        %v690 = vpop.permute.xlu0 %689
        %691 = vrot.lane.b32.xlu0 %v352, 127
        %v692 = vpop.permute.xlu0 %691
        %693 = vrot.lane.b32.xlu0 %v376, 127
        %v694 = vpop.permute.xlu0 %693
        %vm695 = vcmp.lt.s32.totalorder %v398, 127
        %v696 = vsel %vm695, %v692, %v694
        %v697 = vsel %vm695, %v690, %v692
        %v698 = vsel %vm695, %v688, %v690
        %v699 = vsel %vm695, %v686, %v688
        %v700 = vsel %vm695, %v684, %v686
        %v701 = vsel %vm695, %v682, %v684
        %v702 = vsel %vm695, %v680, %v682
        %v703 = vsel %vm695, %v694, %v680
        %v704 = vsel %vm364, 1, 0
        %v705 = vlaneseq
        %v706 = vshrl.u32 %v705, 7
        %v707 = vsub.s32 0, %v706
        %v708 = vrot.slane %v704, %v707
        %v709 = vlaneseq
        %v710 = vshrl.u32 %v709, 7
        %v711 = vsub.s32 1, %v710
        %v712 = vrot.slane %v704, %v711
        %v713 = vlaneseq
        %v714 = vshrl.u32 %v713, 7
        %v715 = vsub.s32 2, %v714
        %v716 = vrot.slane %v704, %v715
        %v717 = vlaneseq
        %v718 = vshrl.u32 %v717, 7
        %v719 = vsub.s32 3, %v718
        %v720 = vrot.slane %v704, %v719
        %v721 = vlaneseq
        %v722 = vshrl.u32 %v721, 7
        %v723 = vsub.s32 4, %v722
        %v724 = vrot.slane %v704, %v723
        %v725 = vlaneseq
        %v726 = vshrl.u32 %v725, 7
        %v727 = vsub.s32 5, %v726
        %v728 = vrot.slane %v704, %v727
        %v729 = vlaneseq
        %v730 = vshrl.u32 %v729, 7
        %v731 = vsub.s32 6, %v730
        %v732 = vrot.slane %v704, %v731
        %v733 = vlaneseq
        %v734 = vshrl.u32 %v733, 7
        %v735 = vsub.s32 7, %v734
        %v736 = vrot.slane %v704, %v735
        %vm737 = vcmp.eq.s32.totalorder %v708, 1
        %vm738 = vcmp.eq.s32.totalorder %v712, 1
        %vm739 = vcmp.eq.s32.totalorder %v716, 1
        %vm740 = vcmp.eq.s32.totalorder %v720, 1
        %vm741 = vcmp.eq.s32.totalorder %v724, 1
        %vm742 = vcmp.eq.s32.totalorder %v728, 1
        %vm743 = vcmp.eq.s32.totalorder %v732, 1
        %vm744 = vcmp.eq.s32.totalorder %v736, 1
        %v745 = vsel %vm737, %v702, 0.0
        %v746 = vsel %vm738, %v701, 0.0
        %v747 = vsel %vm739, %v700, 0.0
        %v748 = vsel %vm740, %v699, 0.0
        %v749 = vsel %vm741, %v698, 0.0
        %v750 = vsel %vm742, %v697, 0.0
        %v751 = vsel %vm743, %v696, 0.0
        %v752 = vsel %vm744, %v703, 0.0
        %753 = vrot.lane.b32.xlu0 %v349, 113
        %v754 = vpop.permute.xlu0 %753
        %755 = vrot.lane.b32.xlu0 %v373, 113
        %v756 = vpop.permute.xlu0 %755
        %757 = vrot.lane.b32.xlu0 %v350, 113
        %v758 = vpop.permute.xlu0 %757
        %759 = vrot.lane.b32.xlu0 %v374, 113
        %v760 = vpop.permute.xlu0 %759
        %761 = vrot.lane.b32.xlu0 %v351, 113
        %v762 = vpop.permute.xlu0 %761
        %763 = vrot.lane.b32.xlu0 %v375, 113
        %v764 = vpop.permute.xlu0 %763
        %765 = vrot.lane.b32.xlu0 %v352, 113
        %v766 = vpop.permute.xlu0 %765
        %767 = vrot.lane.b32.xlu0 %v376, 113
        %v768 = vpop.permute.xlu0 %767
        %vm769 = vcmp.lt.s32.totalorder %v398, 113
        %v770 = vsel %vm769, %v766, %v768
        %v771 = vsel %vm769, %v764, %v766
        %v772 = vsel %vm769, %v762, %v764
        %v773 = vsel %vm769, %v760, %v762
        %v774 = vsel %vm769, %v758, %v760
        %v775 = vsel %vm769, %v756, %v758
        %v776 = vsel %vm769, %v754, %v756
        %v777 = vsel %vm769, %v768, %v754
        %v778 = vsel %vm367, 1, 0
        %v779 = vlaneseq
        %v780 = vshrl.u32 %v779, 7
        %v781 = vsub.s32 0, %v780
        %v782 = vrot.slane %v778, %v781
        %v783 = vlaneseq
        %v784 = vshrl.u32 %v783, 7
        %v785 = vsub.s32 1, %v784
        %v786 = vrot.slane %v778, %v785
        %v787 = vlaneseq
        %v788 = vshrl.u32 %v787, 7
        %v789 = vsub.s32 2, %v788
        %v790 = vrot.slane %v778, %v789
        %v791 = vlaneseq
        %v792 = vshrl.u32 %v791, 7
        %v793 = vsub.s32 3, %v792
        %v794 = vrot.slane %v778, %v793
        %v795 = vlaneseq
        %v796 = vshrl.u32 %v795, 7
        %v797 = vsub.s32 4, %v796
        %v798 = vrot.slane %v778, %v797
        %v799 = vlaneseq
        %v800 = vshrl.u32 %v799, 7
        %v801 = vsub.s32 5, %v800
        %v802 = vrot.slane %v778, %v801
        %v803 = vlaneseq
        %v804 = vshrl.u32 %v803, 7
        %v805 = vsub.s32 6, %v804
        %v806 = vrot.slane %v778, %v805
        %v807 = vlaneseq
        %v808 = vshrl.u32 %v807, 7
        %v809 = vsub.s32 7, %v808
        %v810 = vrot.slane %v778, %v809
        %vm811 = vcmp.eq.s32.totalorder %v782, 1
        %vm812 = vcmp.eq.s32.totalorder %v786, 1
        %vm813 = vcmp.eq.s32.totalorder %v790, 1
        %vm814 = vcmp.eq.s32.totalorder %v794, 1
        %vm815 = vcmp.eq.s32.totalorder %v798, 1
        %vm816 = vcmp.eq.s32.totalorder %v802, 1
        %vm817 = vcmp.eq.s32.totalorder %v806, 1
        %vm818 = vcmp.eq.s32.totalorder %v810, 1
        %v819 = vsel %vm811, %v776, 0.0
        %v820 = vsel %vm812, %v775, 0.0
        %v821 = vsel %vm813, %v774, 0.0
        %v822 = vsel %vm814, %v773, 0.0
        %v823 = vsel %vm815, %v772, 0.0
        %v824 = vsel %vm816, %v771, 0.0
        %v825 = vsel %vm817, %v770, 0.0
        %v826 = vsel %vm818, %v777, 0.0
        %827 = vrot.lane.b32.xlu0 %v349, 112
        %v828 = vpop.permute.xlu0 %827
        %829 = vrot.lane.b32.xlu0 %v373, 112
        %v830 = vpop.permute.xlu0 %829
        %831 = vrot.lane.b32.xlu0 %v350, 112
        %v832 = vpop.permute.xlu0 %831
        %833 = vrot.lane.b32.xlu0 %v374, 112
        %v834 = vpop.permute.xlu0 %833
        %835 = vrot.lane.b32.xlu0 %v351, 112
        %v836 = vpop.permute.xlu0 %835
        %837 = vrot.lane.b32.xlu0 %v375, 112
        %v838 = vpop.permute.xlu0 %837
        %839 = vrot.lane.b32.xlu0 %v352, 112
        %v840 = vpop.permute.xlu0 %839
        %841 = vrot.lane.b32.xlu0 %v376, 112
        %v842 = vpop.permute.xlu0 %841
        %vm843 = vcmp.lt.s32.totalorder %v398, 112
        %v844 = vsel %vm843, %v840, %v842
        %v845 = vsel %vm843, %v838, %v840
        %v846 = vsel %vm843, %v836, %v838
        %v847 = vsel %vm843, %v834, %v836
        %v848 = vsel %vm843, %v832, %v834
        %v849 = vsel %vm843, %v830, %v832
        %v850 = vsel %vm843, %v828, %v830
        %v851 = vsel %vm843, %v842, %v828
        %v852 = vsel %vm366, 1, 0
        %v853 = vlaneseq
        %v854 = vshrl.u32 %v853, 7
        %v855 = vsub.s32 0, %v854
        %v856 = vrot.slane %v852, %v855
        %v857 = vlaneseq
        %v858 = vshrl.u32 %v857, 7
        %v859 = vsub.s32 1, %v858
        %v860 = vrot.slane %v852, %v859
        %v861 = vlaneseq
        %v862 = vshrl.u32 %v861, 7
        %v863 = vsub.s32 2, %v862
        %v864 = vrot.slane %v852, %v863
        %v865 = vlaneseq
        %v866 = vshrl.u32 %v865, 7
        %v867 = vsub.s32 3, %v866
        %v868 = vrot.slane %v852, %v867
        %v869 = vlaneseq
        %v870 = vshrl.u32 %v869, 7
        %v871 = vsub.s32 4, %v870
        %v872 = vrot.slane %v852, %v871
        %v873 = vlaneseq
        %v874 = vshrl.u32 %v873, 7
        %v875 = vsub.s32 5, %v874
        %v876 = vrot.slane %v852, %v875
        %v877 = vlaneseq
        %v878 = vshrl.u32 %v877, 7
        %v879 = vsub.s32 6, %v878
        %v880 = vrot.slane %v852, %v879
        %v881 = vlaneseq
        %v882 = vshrl.u32 %v881, 7
        %v883 = vsub.s32 7, %v882
        %v884 = vrot.slane %v852, %v883
        %vm885 = vcmp.eq.s32.totalorder %v856, 1
        %vm886 = vcmp.eq.s32.totalorder %v860, 1
        %vm887 = vcmp.eq.s32.totalorder %v864, 1
        %vm888 = vcmp.eq.s32.totalorder %v868, 1
        %vm889 = vcmp.eq.s32.totalorder %v872, 1
        %vm890 = vcmp.eq.s32.totalorder %v876, 1
        %vm891 = vcmp.eq.s32.totalorder %v880, 1
        %vm892 = vcmp.eq.s32.totalorder %v884, 1
        %v893 = vsel %vm885, %v850, 0.0
        %v894 = vsel %vm886, %v849, 0.0
        %v895 = vsel %vm887, %v848, 0.0
        %v896 = vsel %vm888, %v847, 0.0
        %v897 = vsel %vm889, %v846, 0.0
        %v898 = vsel %vm890, %v845, 0.0
        %v899 = vsel %vm891, %v844, 0.0
        %v900 = vsel %vm892, %v851, 0.0
        %901 = vrot.lane.b32.xlu0 %v349, 111
        %v902 = vpop.permute.xlu0 %901
        %903 = vrot.lane.b32.xlu0 %v373, 111
        %v904 = vpop.permute.xlu0 %903
        %905 = vrot.lane.b32.xlu0 %v350, 111
        %v906 = vpop.permute.xlu0 %905
        %907 = vrot.lane.b32.xlu0 %v374, 111
        %v908 = vpop.permute.xlu0 %907
        %909 = vrot.lane.b32.xlu0 %v351, 111
        %v910 = vpop.permute.xlu0 %909
        %911 = vrot.lane.b32.xlu0 %v375, 111
        %v912 = vpop.permute.xlu0 %911
        %913 = vrot.lane.b32.xlu0 %v352, 111
        %v914 = vpop.permute.xlu0 %913
        %915 = vrot.lane.b32.xlu0 %v376, 111
        %v916 = vpop.permute.xlu0 %915
        %vm917 = vcmp.lt.s32.totalorder %v398, 111
        %v918 = vsel %vm917, %v914, %v916
        %v919 = vsel %vm917, %v912, %v914
        %v920 = vsel %vm917, %v910, %v912
        %v921 = vsel %vm917, %v908, %v910
        %v922 = vsel %vm917, %v906, %v908
        %v923 = vsel %vm917, %v904, %v906
        %v924 = vsel %vm917, %v902, %v904
        %v925 = vsel %vm917, %v916, %v902
        %v926 = vsel %vm368, 1, 0
        %v927 = vlaneseq
        %v928 = vshrl.u32 %v927, 7
        %v929 = vsub.s32 0, %v928
        %v930 = vrot.slane %v926, %v929
        %v931 = vlaneseq
        %v932 = vshrl.u32 %v931, 7
        %v933 = vsub.s32 1, %v932
        %v934 = vrot.slane %v926, %v933
        %v935 = vlaneseq
        %v936 = vshrl.u32 %v935, 7
        %v937 = vsub.s32 2, %v936
        %v938 = vrot.slane %v926, %v937
        %v939 = vlaneseq
        %v940 = vshrl.u32 %v939, 7
        %v941 = vsub.s32 3, %v940
        %v942 = vrot.slane %v926, %v941
        %v943 = vlaneseq
        %v944 = vshrl.u32 %v943, 7
        %v945 = vsub.s32 4, %v944
        %v946 = vrot.slane %v926, %v945
        %v947 = vlaneseq
        %v948 = vshrl.u32 %v947, 7
        %v949 = vsub.s32 5, %v948
        %v950 = vrot.slane %v926, %v949
        %v951 = vlaneseq
        %v952 = vshrl.u32 %v951, 7
        %v953 = vsub.s32 6, %v952
        %v954 = vrot.slane %v926, %v953
        %v955 = vlaneseq
        %v956 = vshrl.u32 %v955, 7
        %v957 = vsub.s32 7, %v956
        %v958 = vrot.slane %v926, %v957
        %vm959 = vcmp.eq.s32.totalorder %v930, 1
        %vm960 = vcmp.eq.s32.totalorder %v934, 1
        %vm961 = vcmp.eq.s32.totalorder %v938, 1
        %vm962 = vcmp.eq.s32.totalorder %v942, 1
        %vm963 = vcmp.eq.s32.totalorder %v946, 1
        %vm964 = vcmp.eq.s32.totalorder %v950, 1
        %vm965 = vcmp.eq.s32.totalorder %v954, 1
        %vm966 = vcmp.eq.s32.totalorder %v958, 1
        %v967 = vsel %vm959, %v924, 0.0
        %v968 = vsel %vm960, %v923, 0.0
        %v969 = vsel %vm961, %v922, 0.0
        %v970 = vsel %vm962, %v921, 0.0
        %v971 = vsel %vm963, %v920, 0.0
        %v972 = vsel %vm964, %v919, 0.0
        %v973 = vsel %vm965, %v918, 0.0
        %v974 = vsel %vm966, %v925, 0.0
        %v983 = vrot.slane %v523, 4
        %v984 = vrot.slane %v524, 4
        %v985 = vrot.slane %v525, 4
        %v986 = vrot.slane %v526, 4
        %v987 = vrot.slane %v527, 4
        %v988 = vrot.slane %v528, 4
        %v989 = vrot.slane %v529, 4
        %v990 = vrot.slane %v530, 4
        %v1007 = vrot.slane %v671, 4
        %v1008 = vrot.slane %v672, 4
        %v1009 = vrot.slane %v673, 4
        %v1010 = vrot.slane %v674, 4
        %v1011 = vrot.slane %v675, 4
        %v1012 = vrot.slane %v676, 4
        %v1013 = vrot.slane %v677, 4
        %v1014 = vrot.slane %v678, 4
        %v1031 = vrot.slane %v745, 4
        %v1032 = vrot.slane %v746, 4
        %v1033 = vrot.slane %v747, 4
        %v1034 = vrot.slane %v748, 4
        %v1035 = vrot.slane %v749, 4
        %v1036 = vrot.slane %v750, 4
        %v1037 = vrot.slane %v751, 4
        %v1038 = vrot.slane %v752, 4
        %v1055 = vrot.slane %v893, 4
        %v1056 = vrot.slane %v894, 4
        %v1057 = vrot.slane %v895, 4
        %v1058 = vrot.slane %v896, 4
        %v1059 = vrot.slane %v897, 4
        %v1060 = vrot.slane %v898, 4
        %v1061 = vrot.slane %v899, 4
        %v1062 = vrot.slane %v900, 4
        %vm1071 = vcmask 1043456
        %v1072 = vsel %vm1071, %v449, %v983
        %v1073 = vsel %vm1071, %v450, %v984
        %v1074 = vsel %vm1071, %v451, %v985
        %v1075 = vsel %vm1071, %v452, %v986
        %v1076 = vsel %vm1071, %v453, %v987
        %v1077 = vsel %vm1071, %v454, %v988
        %v1078 = vsel %vm1071, %v455, %v989
        %v1079 = vsel %vm1071, %v456, %v990
        %v1080 = vsel %vm1071, %v597, %v1007
        %v1081 = vsel %vm1071, %v598, %v1008
        %v1082 = vsel %vm1071, %v599, %v1009
        %v1083 = vsel %vm1071, %v600, %v1010
        %v1084 = vsel %vm1071, %v601, %v1011
        %v1085 = vsel %vm1071, %v602, %v1012
        %v1086 = vsel %vm1071, %v603, %v1013
        %v1087 = vsel %vm1071, %v604, %v1014
        %v1088 = vsel %vm1071, %v349, %v1031
        %v1089 = vsel %vm1071, %v373, %v1032
        %v1090 = vsel %vm1071, %v350, %v1033
        %v1091 = vsel %vm1071, %v374, %v1034
        %v1092 = vsel %vm1071, %v351, %v1035
        %v1093 = vsel %vm1071, %v375, %v1036
        %v1094 = vsel %vm1071, %v352, %v1037
        %v1095 = vsel %vm1071, %v376, %v1038
        %v1096 = vsel %vm1071, %v819, %v1055
        %v1097 = vsel %vm1071, %v820, %v1056
        %v1098 = vsel %vm1071, %v821, %v1057
        %v1099 = vsel %vm1071, %v822, %v1058
        %v1100 = vsel %vm1071, %v823, %v1059
        %v1101 = vsel %vm1071, %v824, %v1060
        %v1102 = vsel %vm1071, %v825, %v1061
        %v1103 = vsel %vm1071, %v826, %v1062
        %vm1104 = vcmask 293888
        %v1106 = vsel %vm1104, %v353, 0
        %v1109 = vsel %vm1071, %v967, 0
        %v1112 = vsel %vm1071, %v968, 0
        %v1115 = vsel %vm1071, %v969, 0
        %v1118 = vsel %vm1071, %v970, 0
        %v1121 = vsel %vm1071, %v971, 0
        %v1124 = vsel %vm1071, %v972, 0
        %v1127 = vsel %vm1071, %v973, 0
        %v1130 = vsel %vm1071, %v974, 0
        %1132 = vmatprep.subr.mxu0 %v1073
        %1133 = vmatpush1.msra.mxu0 %v1072
        %1134 = vmatprep.subr.mxu0 %v1081
        %1135 = vmatpush1.msra.mxu0 %v1080
        %1136 = vmatprep.subr.mxu0 %v1089
        %1137 = vmatpush1.msra.mxu0 %v1088
        %1138 = vmatprep.subr.mxu0 %v1097
        %1139 = vmatpush1.msra.mxu0 %v1096
        %1140 = vmatprep.subr.mxu0 %v1112
        %1141 = vmatpush1.msra.mxu0 %v1109
        %1142 = vmatprep.subr.mxu0 0.0
        %1143 = vmatpush1.msra.mxu0 0.0
        %1144 = vmatprep.subr.mxu0 0.0
        %1145 = vmatpush1.msra.mxu0 0.0
        %1146 = vmatprep.subr.mxu0 0.0
        %1147 = vmatpush1.msra.mxu0 0.0
        %1148 = vmatprep.subr.mxu0 0.0
        %1149 = vmatpush1.msra.mxu0 0.0
        %1150 = vmatprep.subr.mxu0 0.0
        %1151 = vmatpush1.msra.mxu0 0.0
        %1152 = vmatprep.subr.mxu0 0.0
        %1153 = vmatpush1.msra.mxu0 0.0
        %1154 = vmatprep.subr.mxu0 0.0
        %1155 = vmatpush1.msra.mxu0 0.0
        %1156 = vmatprep.subr.mxu0 0.0
        %1157 = vmatpush1.msra.mxu0 0.0
        %1158 = vmatprep.subr.mxu0 0.0
        %1159 = vmatpush1.msra.mxu0 0.0
        %1160 = vmatprep.subr.mxu0 0.0
        %1161 = vmatpush1.msra.mxu0 0.0
        %1162 = vmatprep.subr.mxu0 0.0
        %1163 = vmatpush1.msra.mxu0 0.0
        %1164 = vmatprep.subr.mxu0 0.0
        %1165 = vmatpush1.msra.mxu0 0.0
        %1166 = vmatprep.subr.mxu0 0.0
        %1167 = vmatpush1.msra.mxu0 0.0
        %1168 = vmatprep.subr.mxu0 0.0
        %1169 = vmatpush1.msra.mxu0 0.0
        %1170 = vmatprep.subr.mxu0 0.0
        %1171 = vmatpush1.msra.mxu0 0.0
        %1172 = vmatprep.subr.mxu0 0.0
        %1173 = vmatpush1.msra.mxu0 0.0
        %1174 = vmatprep.subr.mxu0 0.0
        %1175 = vmatpush1.msra.mxu0 0.0
        %1176 = vmatprep.subr.mxu0 0.0
        %1177 = vmatpush1.msra.mxu0 0.0
        %1178 = vmatprep.subr.mxu0 0.0
        %1179 = vmatpush1.msra.mxu0 0.0
        %1180 = vmatprep.subr.mxu0 0.0
        %1181 = vmatpush1.msra.mxu0 0.0
        %1182 = vmatprep.subr.mxu0 0.0
        %1183 = vmatpush1.msra.mxu0 0.0
        %1184 = vmatprep.subr.mxu0 0.0
        %1185 = vmatpush1.msra.mxu0 0.0
        %1186 = vmatprep.subr.mxu0 0.0
        %1187 = vmatpush1.msra.mxu0 0.0
        %1188 = vmatprep.subr.mxu0 0.0
        %1189 = vmatpush1.msra.mxu0 0.0
        %1190 = vmatprep.subr.mxu0 0.0
        %1191 = vmatpush1.msra.mxu0 0.0
        %1192 = vmatprep.subr.mxu0 0.0
        %1193 = vmatpush1.msra.mxu0 0.0
        %1194 = vmatprep.subr.mxu0 0.0
        %1195 = vmatpush1.msra.mxu0 0.0
        %1196 = vmatprep.mubr.f32.mxu0 0.0
        %1197 = vmatmul.mubr.f32.gmra.mrb[0].mxu0 %v1106
        %v1198 = vpop.f32.mrb[0].mxu0
        %v1199 = vadd.f32 0.0, %v1198
        %v1200 = vpop.f32.mrb[0].mxu0
        %v1201 = vadd.f32 0.0, %v1200
        %1202 = vdwg.mxu0
        %1203 = vmatprep.subr.mxu0 %v1075
        %1204 = vmatpush1.msra.mxu0 %v1074
        %1205 = vmatprep.subr.mxu0 %v1083
        %1206 = vmatpush1.msra.mxu0 %v1082
        %1207 = vmatprep.subr.mxu0 %v1091
        %1208 = vmatpush1.msra.mxu0 %v1090
        %1209 = vmatprep.subr.mxu0 %v1099
        %1210 = vmatpush1.msra.mxu0 %v1098
        %1211 = vmatprep.subr.mxu0 %v1118
        %1212 = vmatpush1.msra.mxu0 %v1115
        %1213 = vmatprep.subr.mxu0 0.0
        %1214 = vmatpush1.msra.mxu0 0.0
        %1215 = vmatprep.subr.mxu0 0.0
        %1216 = vmatpush1.msra.mxu0 0.0
        %1217 = vmatprep.subr.mxu0 0.0
        %1218 = vmatpush1.msra.mxu0 0.0
        %1219 = vmatprep.subr.mxu0 0.0
        %1220 = vmatpush1.msra.mxu0 0.0
        %1221 = vmatprep.subr.mxu0 0.0
        %1222 = vmatpush1.msra.mxu0 0.0
        %1223 = vmatprep.subr.mxu0 0.0
        %1224 = vmatpush1.msra.mxu0 0.0
        %1225 = vmatprep.subr.mxu0 0.0
        %1226 = vmatpush1.msra.mxu0 0.0
        %1227 = vmatprep.subr.mxu0 0.0
        %1228 = vmatpush1.msra.mxu0 0.0
        %1229 = vmatprep.subr.mxu0 0.0
        %1230 = vmatpush1.msra.mxu0 0.0
        %1231 = vmatprep.subr.mxu0 0.0
        %1232 = vmatpush1.msra.mxu0 0.0
        %1233 = vmatprep.subr.mxu0 0.0
        %1234 = vmatpush1.msra.mxu0 0.0
        %1235 = vmatprep.subr.mxu0 0.0
        %1236 = vmatpush1.msra.mxu0 0.0
        %1237 = vmatprep.subr.mxu0 0.0
        %1238 = vmatpush1.msra.mxu0 0.0
        %1239 = vmatprep.subr.mxu0 0.0
        %1240 = vmatpush1.msra.mxu0 0.0
        %1241 = vmatprep.subr.mxu0 0.0
        %1242 = vmatpush1.msra.mxu0 0.0
        %1243 = vmatprep.subr.mxu0 0.0
        %1244 = vmatpush1.msra.mxu0 0.0
        %1245 = vmatprep.subr.mxu0 0.0
        %1246 = vmatpush1.msra.mxu0 0.0
        %1247 = vmatprep.subr.mxu0 0.0
        %1248 = vmatpush1.msra.mxu0 0.0
        %1249 = vmatprep.subr.mxu0 0.0
        %1250 = vmatpush1.msra.mxu0 0.0
        %1251 = vmatprep.subr.mxu0 0.0
        %1252 = vmatpush1.msra.mxu0 0.0
        %1253 = vmatprep.subr.mxu0 0.0
        %1254 = vmatpush1.msra.mxu0 0.0
        %1255 = vmatprep.subr.mxu0 0.0
        %1256 = vmatpush1.msra.mxu0 0.0
        %1257 = vmatprep.subr.mxu0 0.0
        %1258 = vmatpush1.msra.mxu0 0.0
        %1259 = vmatprep.subr.mxu0 0.0
        %1260 = vmatpush1.msra.mxu0 0.0
        %1261 = vmatprep.subr.mxu0 0.0
        %1262 = vmatpush1.msra.mxu0 0.0
        %1263 = vmatprep.subr.mxu0 0.0
        %1264 = vmatpush1.msra.mxu0 0.0
        %1265 = vmatprep.subr.mxu0 0.0
        %1266 = vmatpush1.msra.mxu0 0.0
        %1267 = vmatprep.mubr.f32.mxu0 0.0
        %1268 = vmatmul.mubr.f32.gmra.mrb[0].mxu0 %v1106
        %v1269 = vpop.f32.mrb[0].mxu0
        %v1270 = vadd.f32 0.0, %v1269
        %v1271 = vpop.f32.mrb[0].mxu0
        %v1272 = vadd.f32 0.0, %v1271
        %1273 = vdwg.mxu0
        %1274 = vmatprep.subr.mxu0 %v1077
        %1275 = vmatpush1.msra.mxu0 %v1076
        %1276 = vmatprep.subr.mxu0 %v1085
        %1277 = vmatpush1.msra.mxu0 %v1084
        %1278 = vmatprep.subr.mxu0 %v1093
        %1279 = vmatpush1.msra.mxu0 %v1092
        %1280 = vmatprep.subr.mxu0 %v1101
        %1281 = vmatpush1.msra.mxu0 %v1100
        %1282 = vmatprep.subr.mxu0 %v1124
        %1283 = vmatpush1.msra.mxu0 %v1121
        %1284 = vmatprep.subr.mxu0 0.0
        %1285 = vmatpush1.msra.mxu0 0.0
        %1286 = vmatprep.subr.mxu0 0.0
        %1287 = vmatpush1.msra.mxu0 0.0
        %1288 = vmatprep.subr.mxu0 0.0
        %1289 = vmatpush1.msra.mxu0 0.0
        %1290 = vmatprep.subr.mxu0 0.0
        %1291 = vmatpush1.msra.mxu0 0.0
        %1292 = vmatprep.subr.mxu0 0.0
        %1293 = vmatpush1.msra.mxu0 0.0
        %1294 = vmatprep.subr.mxu0 0.0
        %1295 = vmatpush1.msra.mxu0 0.0
        %1296 = vmatprep.subr.mxu0 0.0
        %1297 = vmatpush1.msra.mxu0 0.0
        %1298 = vmatprep.subr.mxu0 0.0
        %1299 = vmatpush1.msra.mxu0 0.0
        %1300 = vmatprep.subr.mxu0 0.0
        %1301 = vmatpush1.msra.mxu0 0.0
        %1302 = vmatprep.subr.mxu0 0.0
        %1303 = vmatpush1.msra.mxu0 0.0
        %1304 = vmatprep.subr.mxu0 0.0
        %1305 = vmatpush1.msra.mxu0 0.0
        %1306 = vmatprep.subr.mxu0 0.0
        %1307 = vmatpush1.msra.mxu0 0.0
        %1308 = vmatprep.subr.mxu0 0.0
        %1309 = vmatpush1.msra.mxu0 0.0
        %1310 = vmatprep.subr.mxu0 0.0
        %1311 = vmatpush1.msra.mxu0 0.0
        %1312 = vmatprep.subr.mxu0 0.0
        %1313 = vmatpush1.msra.mxu0 0.0
        %1314 = vmatprep.subr.mxu0 0.0
        %1315 = vmatpush1.msra.mxu0 0.0
        %1316 = vmatprep.subr.mxu0 0.0
        %1317 = vmatpush1.msra.mxu0 0.0
        %1318 = vmatprep.subr.mxu0 0.0
        %1319 = vmatpush1.msra.mxu0 0.0
        %1320 = vmatprep.subr.mxu0 0.0
        %1321 = vmatpush1.msra.mxu0 0.0
        %1322 = vmatprep.subr.mxu0 0.0
        %1323 = vmatpush1.msra.mxu0 0.0
        %1324 = vmatprep.subr.mxu0 0.0
        %1325 = vmatpush1.msra.mxu0 0.0
        %1326 = vmatprep.subr.mxu0 0.0
        %1327 = vmatpush1.msra.mxu0 0.0
        %1328 = vmatprep.subr.mxu0 0.0
        %1329 = vmatpush1.msra.mxu0 0.0
        %1330 = vmatprep.subr.mxu0 0.0
        %1331 = vmatpush1.msra.mxu0 0.0
        %1332 = vmatprep.subr.mxu0 0.0
        %1333 = vmatpush1.msra.mxu0 0.0
        %1334 = vmatprep.subr.mxu0 0.0
        %1335 = vmatpush1.msra.mxu0 0.0
        %1336 = vmatprep.subr.mxu0 0.0
        %1337 = vmatpush1.msra.mxu0 0.0
        %1338 = vmatprep.mubr.f32.mxu0 0.0
        %1339 = vmatmul.mubr.f32.gmra.mrb[0].mxu0 %v1106
        %v1340 = vpop.f32.mrb[0].mxu0
        %v1341 = vadd.f32 0.0, %v1340
        %v1342 = vpop.f32.mrb[0].mxu0
        %v1343 = vadd.f32 0.0, %v1342
        %1344 = vdwg.mxu0
        %1345 = vmatprep.subr.mxu0 %v1079
        %1346 = vmatpush1.msra.mxu0 %v1078
        %1347 = vmatprep.subr.mxu0 %v1087
        %1348 = vmatpush1.msra.mxu0 %v1086
        %1349 = vmatprep.subr.mxu0 %v1095
        %1350 = vmatpush1.msra.mxu0 %v1094
        %1351 = vmatprep.subr.mxu0 %v1103
        %1352 = vmatpush1.msra.mxu0 %v1102
        %1353 = vmatprep.subr.mxu0 %v1130
        %1354 = vmatpush1.msra.mxu0 %v1127
        %1355 = vmatprep.subr.mxu0 0.0
        %1356 = vmatpush1.msra.mxu0 0.0
        %1357 = vmatprep.subr.mxu0 0.0
        %1358 = vmatpush1.msra.mxu0 0.0
        %1359 = vmatprep.subr.mxu0 0.0
        %1360 = vmatpush1.msra.mxu0 0.0
        %1361 = vmatprep.subr.mxu0 0.0
        %1362 = vmatpush1.msra.mxu0 0.0
        %1363 = vmatprep.subr.mxu0 0.0
        %1364 = vmatpush1.msra.mxu0 0.0
        %1365 = vmatprep.subr.mxu0 0.0
        %1366 = vmatpush1.msra.mxu0 0.0
        %1367 = vmatprep.subr.mxu0 0.0
        %1368 = vmatpush1.msra.mxu0 0.0
        %1369 = vmatprep.subr.mxu0 0.0
        %1370 = vmatpush1.msra.mxu0 0.0
        %1371 = vmatprep.subr.mxu0 0.0
        %1372 = vmatpush1.msra.mxu0 0.0
        %1373 = vmatprep.subr.mxu0 0.0
        %1374 = vmatpush1.msra.mxu0 0.0
        %1375 = vmatprep.subr.mxu0 0.0
        %1376 = vmatpush1.msra.mxu0 0.0
        %1377 = vmatprep.subr.mxu0 0.0
        %1378 = vmatpush1.msra.mxu0 0.0
        %1379 = vmatprep.subr.mxu0 0.0
        %1380 = vmatpush1.msra.mxu0 0.0
        %1381 = vmatprep.subr.mxu0 0.0
        %1382 = vmatpush1.msra.mxu0 0.0
        %1383 = vmatprep.subr.mxu0 0.0
        %1384 = vmatpush1.msra.mxu0 0.0
        %1385 = vmatprep.subr.mxu0 0.0
        %1386 = vmatpush1.msra.mxu0 0.0
        %1387 = vmatprep.subr.mxu0 0.0
        %1388 = vmatpush1.msra.mxu0 0.0
        %1389 = vmatprep.subr.mxu0 0.0
        %1390 = vmatpush1.msra.mxu0 0.0
        %1391 = vmatprep.subr.mxu0 0.0
        %1392 = vmatpush1.msra.mxu0 0.0
        %1393 = vmatprep.subr.mxu0 0.0
        %1394 = vmatpush1.msra.mxu0 0.0
        %1395 = vmatprep.subr.mxu0 0.0
        %1396 = vmatpush1.msra.mxu0 0.0
        %1397 = vmatprep.subr.mxu0 0.0
        %1398 = vmatpush1.msra.mxu0 0.0
        %1399 = vmatprep.subr.mxu0 0.0
        %1400 = vmatpush1.msra.mxu0 0.0
        %1401 = vmatprep.subr.mxu0 0.0
        %1402 = vmatpush1.msra.mxu0 0.0
        %1403 = vmatprep.subr.mxu0 0.0
        %1404 = vmatpush1.msra.mxu0 0.0
        %1405 = vmatprep.subr.mxu0 0.0
        %1406 = vmatpush1.msra.mxu0 0.0
        %1407 = vmatprep.subr.mxu0 0.0
        %1408 = vmatpush1.msra.mxu0 0.0
        %1409 = vmatprep.mubr.f32.mxu0 0.0
        %1410 = vmatmul.mubr.f32.gmra.mrb[0].mxu0 %v1106
        %v1411 = vpop.f32.mrb[0].mxu0
        %v1412 = vadd.f32 0.0, %v1411
        %v1413 = vpop.f32.mrb[0].mxu0
        %v1414 = vadd.f32 0.0, %v1413
        %1415 = vdwg.mxu0
        %1417 = vset.pattern.permute.xlu0 0
        %1418 = vperm.xlu0 %1417, %v355
        %v1419 = vpop.permute.xlu0 %1418
        %v1421 = vmul.f32 %v1199, %v1419
        %v1422 = vmul.f32 %v1201, %v1419
        %v1423 = vmul.f32 %v1270, %v1419
        %v1424 = vmul.f32 %v1272, %v1419
        %v1425 = vmul.f32 %v1341, %v1419
        %v1426 = vmul.f32 %v1343, %v1419
        %v1427 = vmul.f32 %v1412, %v1419
        %v1428 = vmul.f32 %v1414, %v1419
        %1430 = vset.pattern.permute.xlu0 0
        %1431 = vperm.xlu0 %1430, %v356
        %v1432 = vpop.permute.xlu0 %1431
        %v1434 = vadd.f32 %v1421, %v1432
        %v1435 = vadd.f32 %v1422, %v1432
        %v1436 = vadd.f32 %v1423, %v1432
        %v1437 = vadd.f32 %v1424, %v1432
        %v1438 = vadd.f32 %v1425, %v1432
        %v1439 = vadd.f32 %v1426, %v1432
        %v1440 = vadd.f32 %v1427, %v1432
        %v1441 = vadd.f32 %v1428, %v1432
        %v1442 = vmax.f32 %v1434, 0.0
        %v1443 = vmax.f32 %v1435, 0.0
        %v1444 = vmax.f32 %v1436, 0.0
        %v1445 = vmax.f32 %v1437, 0.0
        %v1446 = vmax.f32 %v1438, 0.0
        %v1447 = vmax.f32 %v1439, 0.0
        %v1448 = vmax.f32 %v1440, 0.0
        %v1449 = vmax.f32 %v1441, 0.0
        %1450 = vrot.lane.b32.xlu0 %v1442, 17
        %v1451 = vpop.permute.xlu0 %1450
        %1452 = vrot.lane.b32.xlu0 %v1443, 17
        %v1453 = vpop.permute.xlu0 %1452
        %1454 = vrot.lane.b32.xlu0 %v1444, 17
        %v1455 = vpop.permute.xlu0 %1454
        %1456 = vrot.lane.b32.xlu0 %v1445, 17
        %v1457 = vpop.permute.xlu0 %1456
        %1458 = vrot.lane.b32.xlu0 %v1446, 17
        %v1459 = vpop.permute.xlu0 %1458
        %1460 = vrot.lane.b32.xlu0 %v1447, 17
        %v1461 = vpop.permute.xlu0 %1460
        %1462 = vrot.lane.b32.xlu0 %v1448, 17
        %v1463 = vpop.permute.xlu0 %1462
        %1464 = vrot.lane.b32.xlu0 %v1449, 17
        %v1465 = vpop.permute.xlu0 %1464
        %v1466 = vsel %vm399, %v1463, %v1465
        %v1467 = vsel %vm399, %v1461, %v1463
        %v1468 = vsel %vm399, %v1459, %v1461
        %v1469 = vsel %vm399, %v1457, %v1459
        %v1470 = vsel %vm399, %v1455, %v1457
        %v1471 = vsel %vm399, %v1453, %v1455
        %v1472 = vsel %vm399, %v1451, %v1453
        %v1473 = vsel %vm399, %v1465, %v1451
        %v1474 = vsel %vm441, %v1473, 0.0
        %v1475 = vsel %vm442, %v1472, 0.0
        %v1476 = vsel %vm443, %v1471, 0.0
        %v1477 = vsel %vm444, %v1470, 0.0
        %v1478 = vsel %vm445, %v1469, 0.0
        %v1479 = vsel %vm446, %v1468, 0.0
        %v1480 = vsel %vm447, %v1467, 0.0
        %v1481 = vsel %vm448, %v1466, 0.0
        %1482 = vrot.lane.b32.xlu0 %v1442, 16
        %v1483 = vpop.permute.xlu0 %1482
        %1484 = vrot.lane.b32.xlu0 %v1443, 16
        %v1485 = vpop.permute.xlu0 %1484
        %1486 = vrot.lane.b32.xlu0 %v1444, 16
        %v1487 = vpop.permute.xlu0 %1486
        %1488 = vrot.lane.b32.xlu0 %v1445, 16
        %v1489 = vpop.permute.xlu0 %1488
        %1490 = vrot.lane.b32.xlu0 %v1446, 16
        %v1491 = vpop.permute.xlu0 %1490
        %1492 = vrot.lane.b32.xlu0 %v1447, 16
        %v1493 = vpop.permute.xlu0 %1492
        %1494 = vrot.lane.b32.xlu0 %v1448, 16
        %v1495 = vpop.permute.xlu0 %1494
        %1496 = vrot.lane.b32.xlu0 %v1449, 16
        %v1497 = vpop.permute.xlu0 %1496
        %v1498 = vsel %vm473, %v1495, %v1497
        %v1499 = vsel %vm473, %v1493, %v1495
        %v1500 = vsel %vm473, %v1491, %v1493
        %v1501 = vsel %vm473, %v1489, %v1491
        %v1502 = vsel %vm473, %v1487, %v1489
        %v1503 = vsel %vm473, %v1485, %v1487
        %v1504 = vsel %vm473, %v1483, %v1485
        %v1505 = vsel %vm473, %v1497, %v1483
        %v1506 = vsel %vm515, %v1505, 0.0
        %v1507 = vsel %vm516, %v1504, 0.0
        %v1508 = vsel %vm517, %v1503, 0.0
        %v1509 = vsel %vm518, %v1502, 0.0
        %v1510 = vsel %vm519, %v1501, 0.0
        %v1511 = vsel %vm520, %v1500, 0.0
        %v1512 = vsel %vm521, %v1499, 0.0
        %v1513 = vsel %vm522, %v1498, 0.0
        %1514 = vrot.lane.b32.xlu0 %v1442, 15
        %v1515 = vpop.permute.xlu0 %1514
        %1516 = vrot.lane.b32.xlu0 %v1443, 15
        %v1517 = vpop.permute.xlu0 %1516
        %1518 = vrot.lane.b32.xlu0 %v1444, 15
        %v1519 = vpop.permute.xlu0 %1518
        %1520 = vrot.lane.b32.xlu0 %v1445, 15
        %v1521 = vpop.permute.xlu0 %1520
        %1522 = vrot.lane.b32.xlu0 %v1446, 15
        %v1523 = vpop.permute.xlu0 %1522
        %1524 = vrot.lane.b32.xlu0 %v1447, 15
        %v1525 = vpop.permute.xlu0 %1524
        %1526 = vrot.lane.b32.xlu0 %v1448, 15
        %v1527 = vpop.permute.xlu0 %1526
        %1528 = vrot.lane.b32.xlu0 %v1449, 15
        %v1529 = vpop.permute.xlu0 %1528
        %v1530 = vsel %vm547, %v1527, %v1529
        %v1531 = vsel %vm547, %v1525, %v1527
        %v1532 = vsel %vm547, %v1523, %v1525
        %v1533 = vsel %vm547, %v1521, %v1523
        %v1534 = vsel %vm547, %v1519, %v1521
        %v1535 = vsel %vm547, %v1517, %v1519
        %v1536 = vsel %vm547, %v1515, %v1517
        %v1537 = vsel %vm547, %v1529, %v1515
        %v1538 = vsel %vm589, %v1537, 0.0
        %v1539 = vsel %vm590, %v1536, 0.0
        %v1540 = vsel %vm591, %v1535, 0.0
        %v1541 = vsel %vm592, %v1534, 0.0
        %v1542 = vsel %vm593, %v1533, 0.0
        %v1543 = vsel %vm594, %v1532, 0.0
        %v1544 = vsel %vm595, %v1531, 0.0
        %v1545 = vsel %vm596, %v1530, 0.0
        %1546 = vrot.lane.b32.xlu0 %v1442, 1
        %v1547 = vpop.permute.xlu0 %1546
        %1548 = vrot.lane.b32.xlu0 %v1443, 1
        %v1549 = vpop.permute.xlu0 %1548
        %1550 = vrot.lane.b32.xlu0 %v1444, 1
        %v1551 = vpop.permute.xlu0 %1550
        %1552 = vrot.lane.b32.xlu0 %v1445, 1
        %v1553 = vpop.permute.xlu0 %1552
        %1554 = vrot.lane.b32.xlu0 %v1446, 1
        %v1555 = vpop.permute.xlu0 %1554
        %1556 = vrot.lane.b32.xlu0 %v1447, 1
        %v1557 = vpop.permute.xlu0 %1556
        %1558 = vrot.lane.b32.xlu0 %v1448, 1
        %v1559 = vpop.permute.xlu0 %1558
        %1560 = vrot.lane.b32.xlu0 %v1449, 1
        %v1561 = vpop.permute.xlu0 %1560
        %v1562 = vsel %vm621, %v1559, %v1561
        %v1563 = vsel %vm621, %v1557, %v1559
        %v1564 = vsel %vm621, %v1555, %v1557
        %v1565 = vsel %vm621, %v1553, %v1555
        %v1566 = vsel %vm621, %v1551, %v1553
        %v1567 = vsel %vm621, %v1549, %v1551
        %v1568 = vsel %vm621, %v1547, %v1549
        %v1569 = vsel %vm621, %v1561, %v1547
        %v1570 = vsel %vm663, %v1569, 0.0
        %v1571 = vsel %vm664, %v1568, 0.0
        %v1572 = vsel %vm665, %v1567, 0.0
        %v1573 = vsel %vm666, %v1566, 0.0
        %v1574 = vsel %vm667, %v1565, 0.0
        %v1575 = vsel %vm668, %v1564, 0.0
        %v1576 = vsel %vm669, %v1563, 0.0
        %v1577 = vsel %vm670, %v1562, 0.0
        %1578 = vrot.lane.b32.xlu0 %v1442, 127
        %v1579 = vpop.permute.xlu0 %1578
        %1580 = vrot.lane.b32.xlu0 %v1443, 127
        %v1581 = vpop.permute.xlu0 %1580
        %1582 = vrot.lane.b32.xlu0 %v1444, 127
        %v1583 = vpop.permute.xlu0 %1582
        %1584 = vrot.lane.b32.xlu0 %v1445, 127
        %v1585 = vpop.permute.xlu0 %1584
        %1586 = vrot.lane.b32.xlu0 %v1446, 127
        %v1587 = vpop.permute.xlu0 %1586
        %1588 = vrot.lane.b32.xlu0 %v1447, 127
        %v1589 = vpop.permute.xlu0 %1588
        %1590 = vrot.lane.b32.xlu0 %v1448, 127
        %v1591 = vpop.permute.xlu0 %1590
        %1592 = vrot.lane.b32.xlu0 %v1449, 127
        %v1593 = vpop.permute.xlu0 %1592
        %v1594 = vsel %vm695, %v1591, %v1593
        %v1595 = vsel %vm695, %v1589, %v1591
        %v1596 = vsel %vm695, %v1587, %v1589
        %v1597 = vsel %vm695, %v1585, %v1587
        %v1598 = vsel %vm695, %v1583, %v1585
        %v1599 = vsel %vm695, %v1581, %v1583
        %v1600 = vsel %vm695, %v1579, %v1581
        %v1601 = vsel %vm695, %v1593, %v1579
        %v1602 = vsel %vm737, %v1600, 0.0
        %v1603 = vsel %vm738, %v1599, 0.0
        %v1604 = vsel %vm739, %v1598, 0.0
        %v1605 = vsel %vm740, %v1597, 0.0
        %v1606 = vsel %vm741, %v1596, 0.0
        %v1607 = vsel %vm742, %v1595, 0.0
        %v1608 = vsel %vm743, %v1594, 0.0
        %v1609 = vsel %vm744, %v1601, 0.0
        %1610 = vrot.lane.b32.xlu0 %v1442, 113
        %v1611 = vpop.permute.xlu0 %1610
        %1612 = vrot.lane.b32.xlu0 %v1443, 113
        %v1613 = vpop.permute.xlu0 %1612
        %1614 = vrot.lane.b32.xlu0 %v1444, 113
        %v1615 = vpop.permute.xlu0 %1614
        %1616 = vrot.lane.b32.xlu0 %v1445, 113
        %v1617 = vpop.permute.xlu0 %1616
        %1618 = vrot.lane.b32.xlu0 %v1446, 113
        %v1619 = vpop.permute.xlu0 %1618
        %1620 = vrot.lane.b32.xlu0 %v1447, 113
        %v1621 = vpop.permute.xlu0 %1620
        %1622 = vrot.lane.b32.xlu0 %v1448, 113
        %v1623 = vpop.permute.xlu0 %1622
        %1624 = vrot.lane.b32.xlu0 %v1449, 113
        %v1625 = vpop.permute.xlu0 %1624
        %v1626 = vsel %vm769, %v1623, %v1625
        %v1627 = vsel %vm769, %v1621, %v1623
        %v1628 = vsel %vm769, %v1619, %v1621
        %v1629 = vsel %vm769, %v1617, %v1619
        %v1630 = vsel %vm769, %v1615, %v1617
        %v1631 = vsel %vm769, %v1613, %v1615
        %v1632 = vsel %vm769, %v1611, %v1613
        %v1633 = vsel %vm769, %v1625, %v1611
        %v1634 = vsel %vm811, %v1632, 0.0
        %v1635 = vsel %vm812, %v1631, 0.0
        %v1636 = vsel %vm813, %v1630, 0.0
        %v1637 = vsel %vm814, %v1629, 0.0
        %v1638 = vsel %vm815, %v1628, 0.0
        %v1639 = vsel %vm816, %v1627, 0.0
        %v1640 = vsel %vm817, %v1626, 0.0
        %v1641 = vsel %vm818, %v1633, 0.0
        %1642 = vrot.lane.b32.xlu0 %v1442, 112
        %v1643 = vpop.permute.xlu0 %1642
        %1644 = vrot.lane.b32.xlu0 %v1443, 112
        %v1645 = vpop.permute.xlu0 %1644
        %1646 = vrot.lane.b32.xlu0 %v1444, 112
        %v1647 = vpop.permute.xlu0 %1646
        %1648 = vrot.lane.b32.xlu0 %v1445, 112
        %v1649 = vpop.permute.xlu0 %1648
        %1650 = vrot.lane.b32.xlu0 %v1446, 112
        %v1651 = vpop.permute.xlu0 %1650
        %1652 = vrot.lane.b32.xlu0 %v1447, 112
        %v1653 = vpop.permute.xlu0 %1652
        %1654 = vrot.lane.b32.xlu0 %v1448, 112
        %v1655 = vpop.permute.xlu0 %1654
        %1656 = vrot.lane.b32.xlu0 %v1449, 112
        %v1657 = vpop.permute.xlu0 %1656
        %v1658 = vsel %vm843, %v1655, %v1657
        %v1659 = vsel %vm843, %v1653, %v1655
        %v1660 = vsel %vm843, %v1651, %v1653
        %v1661 = vsel %vm843, %v1649, %v1651
        %v1662 = vsel %vm843, %v1647, %v1649
        %v1663 = vsel %vm843, %v1645, %v1647
        %v1664 = vsel %vm843, %v1643, %v1645
        %v1665 = vsel %vm843, %v1657, %v1643
        %v1666 = vsel %vm885, %v1664, 0.0
        %v1667 = vsel %vm886, %v1663, 0.0
        %v1668 = vsel %vm887, %v1662, 0.0
        %v1669 = vsel %vm888, %v1661, 0.0
        %v1670 = vsel %vm889, %v1660, 0.0
        %v1671 = vsel %vm890, %v1659, 0.0
        %v1672 = vsel %vm891, %v1658, 0.0
        %v1673 = vsel %vm892, %v1665, 0.0
        %1674 = vrot.lane.b32.xlu0 %v1442, 111
        %v1675 = vpop.permute.xlu0 %1674
        %1676 = vrot.lane.b32.xlu0 %v1443, 111
        %v1677 = vpop.permute.xlu0 %1676
        %1678 = vrot.lane.b32.xlu0 %v1444, 111
        %v1679 = vpop.permute.xlu0 %1678
        %1680 = vrot.lane.b32.xlu0 %v1445, 111
        %v1681 = vpop.permute.xlu0 %1680
        %1682 = vrot.lane.b32.xlu0 %v1446, 111
        %v1683 = vpop.permute.xlu0 %1682
        %1684 = vrot.lane.b32.xlu0 %v1447, 111
        %v1685 = vpop.permute.xlu0 %1684
        %1686 = vrot.lane.b32.xlu0 %v1448, 111
        %v1687 = vpop.permute.xlu0 %1686
        %1688 = vrot.lane.b32.xlu0 %v1449, 111
        %v1689 = vpop.permute.xlu0 %1688
        %v1690 = vsel %vm917, %v1687, %v1689
        %v1691 = vsel %vm917, %v1685, %v1687
        %v1692 = vsel %vm917, %v1683, %v1685
        %v1693 = vsel %vm917, %v1681, %v1683
        %v1694 = vsel %vm917, %v1679, %v1681
        %v1695 = vsel %vm917, %v1677, %v1679
        %v1696 = vsel %vm917, %v1675, %v1677
        %v1697 = vsel %vm917, %v1689, %v1675
        %v1698 = vsel %vm959, %v1696, 0.0
        %v1699 = vsel %vm960, %v1695, 0.0
        %v1700 = vsel %vm961, %v1694, 0.0
        %v1701 = vsel %vm962, %v1693, 0.0
        %v1702 = vsel %vm963, %v1692, 0.0
        %v1703 = vsel %vm964, %v1691, 0.0
        %v1704 = vsel %vm965, %v1690, 0.0
        %v1705 = vsel %vm966, %v1697, 0.0
        %v1714 = vrot.slane %v1506, 4
        %v1715 = vrot.slane %v1507, 4
        %v1716 = vrot.slane %v1508, 4
        %v1717 = vrot.slane %v1509, 4
        %v1718 = vrot.slane %v1510, 4
        %v1719 = vrot.slane %v1511, 4
        %v1720 = vrot.slane %v1512, 4
        %v1721 = vrot.slane %v1513, 4
        %v1738 = vrot.slane %v1570, 4
        %v1739 = vrot.slane %v1571, 4
        %v1740 = vrot.slane %v1572, 4
        %v1741 = vrot.slane %v1573, 4
        %v1742 = vrot.slane %v1574, 4
        %v1743 = vrot.slane %v1575, 4
        %v1744 = vrot.slane %v1576, 4
        %v1745 = vrot.slane %v1577, 4
        %v1762 = vrot.slane %v1602, 4
        %v1763 = vrot.slane %v1603, 4
        %v1764 = vrot.slane %v1604, 4
        %v1765 = vrot.slane %v1605, 4
        %v1766 = vrot.slane %v1606, 4
        %v1767 = vrot.slane %v1607, 4
        %v1768 = vrot.slane %v1608, 4
        %v1769 = vrot.slane %v1609, 4
        %v1786 = vrot.slane %v1666, 4
        %v1787 = vrot.slane %v1667, 4
        %v1788 = vrot.slane %v1668, 4
        %v1789 = vrot.slane %v1669, 4
        %v1790 = vrot.slane %v1670, 4
        %v1791 = vrot.slane %v1671, 4
        %v1792 = vrot.slane %v1672, 4
        %v1793 = vrot.slane %v1673, 4
        %v1802 = vsel %vm1071, %v1474, %v1714
        %v1803 = vsel %vm1071, %v1475, %v1715
        %v1804 = vsel %vm1071, %v1476, %v1716
        %v1805 = vsel %vm1071, %v1477, %v1717
        %v1806 = vsel %vm1071, %v1478, %v1718
        %v1807 = vsel %vm1071, %v1479, %v1719
        %v1808 = vsel %vm1071, %v1480, %v1720
        %v1809 = vsel %vm1071, %v1481, %v1721
        %v1810 = vsel %vm1071, %v1538, %v1738
        %v1811 = vsel %vm1071, %v1539, %v1739
        %v1812 = vsel %vm1071, %v1540, %v1740
        %v1813 = vsel %vm1071, %v1541, %v1741
        %v1814 = vsel %vm1071, %v1542, %v1742
        %v1815 = vsel %vm1071, %v1543, %v1743
        %v1816 = vsel %vm1071, %v1544, %v1744
        %v1817 = vsel %vm1071, %v1545, %v1745
        %v1818 = vsel %vm1071, %v1442, %v1762
        %v1819 = vsel %vm1071, %v1443, %v1763
        %v1820 = vsel %vm1071, %v1444, %v1764
        %v1821 = vsel %vm1071, %v1445, %v1765
        %v1822 = vsel %vm1071, %v1446, %v1766
        %v1823 = vsel %vm1071, %v1447, %v1767
        %v1824 = vsel %vm1071, %v1448, %v1768
        %v1825 = vsel %vm1071, %v1449, %v1769
        %v1826 = vsel %vm1071, %v1634, %v1786
        %v1827 = vsel %vm1071, %v1635, %v1787
        %v1828 = vsel %vm1071, %v1636, %v1788
        %v1829 = vsel %vm1071, %v1637, %v1789
        %v1830 = vsel %vm1071, %v1638, %v1790
        %v1831 = vsel %vm1071, %v1639, %v1791
        %v1832 = vsel %vm1071, %v1640, %v1792
        %v1833 = vsel %vm1071, %v1641, %v1793
        %v1835 = vsel %vm1104, %v354, 0
        %v1838 = vsel %vm1071, %v1698, 0
        %v1841 = vsel %vm1071, %v1699, 0
        %v1844 = vsel %vm1071, %v1700, 0
        %v1847 = vsel %vm1071, %v1701, 0
        %v1850 = vsel %vm1071, %v1702, 0
        %v1853 = vsel %vm1071, %v1703, 0
        %v1856 = vsel %vm1071, %v1704, 0
        %v1859 = vsel %vm1071, %v1705, 0
        %1861 = vmatprep.subr.mxu0 %v1803
        %1862 = vmatpush1.msra.mxu0 %v1802
        %1863 = vmatprep.subr.mxu0 %v1811
        %1864 = vmatpush1.msra.mxu0 %v1810
        %1865 = vmatprep.subr.mxu0 %v1819
        %1866 = vmatpush1.msra.mxu0 %v1818
        %1867 = vmatprep.subr.mxu0 %v1827
        %1868 = vmatpush1.msra.mxu0 %v1826
        %1869 = vmatprep.subr.mxu0 %v1841
        %1870 = vmatpush1.msra.mxu0 %v1838
        %1871 = vmatprep.subr.mxu0 0.0
        %1872 = vmatpush1.msra.mxu0 0.0
        %1873 = vmatprep.subr.mxu0 0.0
        %1874 = vmatpush1.msra.mxu0 0.0
        %1875 = vmatprep.subr.mxu0 0.0
        %1876 = vmatpush1.msra.mxu0 0.0
        %1877 = vmatprep.subr.mxu0 0.0
        %1878 = vmatpush1.msra.mxu0 0.0
        %1879 = vmatprep.subr.mxu0 0.0
        %1880 = vmatpush1.msra.mxu0 0.0
        %1881 = vmatprep.subr.mxu0 0.0
        %1882 = vmatpush1.msra.mxu0 0.0
        %1883 = vmatprep.subr.mxu0 0.0
        %1884 = vmatpush1.msra.mxu0 0.0
        %1885 = vmatprep.subr.mxu0 0.0
        %1886 = vmatpush1.msra.mxu0 0.0
        %1887 = vmatprep.subr.mxu0 0.0
        %1888 = vmatpush1.msra.mxu0 0.0
        %1889 = vmatprep.subr.mxu0 0.0
        %1890 = vmatpush1.msra.mxu0 0.0
        %1891 = vmatprep.subr.mxu0 0.0
        %1892 = vmatpush1.msra.mxu0 0.0
        %1893 = vmatprep.subr.mxu0 0.0
        %1894 = vmatpush1.msra.mxu0 0.0
        %1895 = vmatprep.subr.mxu0 0.0
        %1896 = vmatpush1.msra.mxu0 0.0
        %1897 = vmatprep.subr.mxu0 0.0
        %1898 = vmatpush1.msra.mxu0 0.0
        %1899 = vmatprep.subr.mxu0 0.0
        %1900 = vmatpush1.msra.mxu0 0.0
        %1901 = vmatprep.subr.mxu0 0.0
        %1902 = vmatpush1.msra.mxu0 0.0
        %1903 = vmatprep.subr.mxu0 0.0
        %1904 = vmatpush1.msra.mxu0 0.0
        %1905 = vmatprep.subr.mxu0 0.0
        %1906 = vmatpush1.msra.mxu0 0.0
        %1907 = vmatprep.subr.mxu0 0.0
        %1908 = vmatpush1.msra.mxu0 0.0
        %1909 = vmatprep.subr.mxu0 0.0
        %1910 = vmatpush1.msra.mxu0 0.0
        %1911 = vmatprep.subr.mxu0 0.0
        %1912 = vmatpush1.msra.mxu0 0.0
        %1913 = vmatprep.subr.mxu0 0.0
        %1914 = vmatpush1.msra.mxu0 0.0
        %1915 = vmatprep.subr.mxu0 0.0
        %1916 = vmatpush1.msra.mxu0 0.0
        %1917 = vmatprep.subr.mxu0 0.0
        %1918 = vmatpush1.msra.mxu0 0.0
        %1919 = vmatprep.subr.mxu0 0.0
        %1920 = vmatpush1.msra.mxu0 0.0
        %1921 = vmatprep.subr.mxu0 0.0
        %1922 = vmatpush1.msra.mxu0 0.0
        %1923 = vmatprep.subr.mxu0 0.0
        %1924 = vmatpush1.msra.mxu0 0.0
        %1925 = vmatprep.mubr.f32.mxu0 0.0
        %1926 = vmatmul.mubr.f32.gmra.mrb[0].mxu0 %v1835
        %v1927 = vpop.f32.mrb[0].mxu0
        %v1928 = vadd.f32 0.0, %v1927
        %v1929 = vpop.f32.mrb[0].mxu0
        %v1930 = vadd.f32 0.0, %v1929
        %1931 = vdwg.mxu0
        %1932 = vmatprep.subr.mxu0 %v1805
        %1933 = vmatpush1.msra.mxu0 %v1804
        %1934 = vmatprep.subr.mxu0 %v1813
        %1935 = vmatpush1.msra.mxu0 %v1812
        %1936 = vmatprep.subr.mxu0 %v1821
        %1937 = vmatpush1.msra.mxu0 %v1820
        %1938 = vmatprep.subr.mxu0 %v1829
        %1939 = vmatpush1.msra.mxu0 %v1828
        %1940 = vmatprep.subr.mxu0 %v1847
        %1941 = vmatpush1.msra.mxu0 %v1844
        %1942 = vmatprep.subr.mxu0 0.0
        %1943 = vmatpush1.msra.mxu0 0.0
        %1944 = vmatprep.subr.mxu0 0.0
        %1945 = vmatpush1.msra.mxu0 0.0
        %1946 = vmatprep.subr.mxu0 0.0
        %1947 = vmatpush1.msra.mxu0 0.0
        %1948 = vmatprep.subr.mxu0 0.0
        %1949 = vmatpush1.msra.mxu0 0.0
        %1950 = vmatprep.subr.mxu0 0.0
        %1951 = vmatpush1.msra.mxu0 0.0
        %1952 = vmatprep.subr.mxu0 0.0
        %1953 = vmatpush1.msra.mxu0 0.0
        %1954 = vmatprep.subr.mxu0 0.0
        %1955 = vmatpush1.msra.mxu0 0.0
        %1956 = vmatprep.subr.mxu0 0.0
        %1957 = vmatpush1.msra.mxu0 0.0
        %1958 = vmatprep.subr.mxu0 0.0
        %1959 = vmatpush1.msra.mxu0 0.0
        %1960 = vmatprep.subr.mxu0 0.0
        %1961 = vmatpush1.msra.mxu0 0.0
        %1962 = vmatprep.subr.mxu0 0.0
        %1963 = vmatpush1.msra.mxu0 0.0
        %1964 = vmatprep.subr.mxu0 0.0
        %1965 = vmatpush1.msra.mxu0 0.0
        %1966 = vmatprep.subr.mxu0 0.0
        %1967 = vmatpush1.msra.mxu0 0.0
        %1968 = vmatprep.subr.mxu0 0.0
        %1969 = vmatpush1.msra.mxu0 0.0
        %1970 = vmatprep.subr.mxu0 0.0
        %1971 = vmatpush1.msra.mxu0 0.0
        %1972 = vmatprep.subr.mxu0 0.0
        %1973 = vmatpush1.msra.mxu0 0.0
        %1974 = vmatprep.subr.mxu0 0.0
        %1975 = vmatpush1.msra.mxu0 0.0
        %1976 = vmatprep.subr.mxu0 0.0
        %1977 = vmatpush1.msra.mxu0 0.0
        %1978 = vmatprep.subr.mxu0 0.0
        %1979 = vmatpush1.msra.mxu0 0.0
        %1980 = vmatprep.subr.mxu0 0.0
        %1981 = vmatpush1.msra.mxu0 0.0
        %1982 = vmatprep.subr.mxu0 0.0
        %1983 = vmatpush1.msra.mxu0 0.0
        %1984 = vmatprep.subr.mxu0 0.0
        %1985 = vmatpush1.msra.mxu0 0.0
        %1986 = vmatprep.subr.mxu0 0.0
        %1987 = vmatpush1.msra.mxu0 0.0
        %1988 = vmatprep.subr.mxu0 0.0
        %1989 = vmatpush1.msra.mxu0 0.0
        %1990 = vmatprep.subr.mxu0 0.0
        %1991 = vmatpush1.msra.mxu0 0.0
        %1992 = vmatprep.subr.mxu0 0.0
        %1993 = vmatpush1.msra.mxu0 0.0
        %1994 = vmatprep.subr.mxu0 0.0
        %1995 = vmatpush1.msra.mxu0 0.0
        %1996 = vmatprep.mubr.f32.mxu0 0.0
        %1997 = vmatmul.mubr.f32.gmra.mrb[0].mxu0 %v1835
        %v1998 = vpop.f32.mrb[0].mxu0
        %v1999 = vadd.f32 0.0, %v1998
        %v2000 = vpop.f32.mrb[0].mxu0
        %v2001 = vadd.f32 0.0, %v2000
        %2002 = vdwg.mxu0
        %2003 = vmatprep.subr.mxu0 %v1807
        %2004 = vmatpush1.msra.mxu0 %v1806
        %2005 = vmatprep.subr.mxu0 %v1815
        %2006 = vmatpush1.msra.mxu0 %v1814
        %2007 = vmatprep.subr.mxu0 %v1823
        %2008 = vmatpush1.msra.mxu0 %v1822
        %2009 = vmatprep.subr.mxu0 %v1831
        %2010 = vmatpush1.msra.mxu0 %v1830
        %2011 = vmatprep.subr.mxu0 %v1853
        %2012 = vmatpush1.msra.mxu0 %v1850
        %2013 = vmatprep.subr.mxu0 0.0
        %2014 = vmatpush1.msra.mxu0 0.0
        %2015 = vmatprep.subr.mxu0 0.0
        %2016 = vmatpush1.msra.mxu0 0.0
        %2017 = vmatprep.subr.mxu0 0.0
        %2018 = vmatpush1.msra.mxu0 0.0
        %2019 = vmatprep.subr.mxu0 0.0
        %2020 = vmatpush1.msra.mxu0 0.0
        %2021 = vmatprep.subr.mxu0 0.0
        %2022 = vmatpush1.msra.mxu0 0.0
        %2023 = vmatprep.subr.mxu0 0.0
        %2024 = vmatpush1.msra.mxu0 0.0
        %2025 = vmatprep.subr.mxu0 0.0
        %2026 = vmatpush1.msra.mxu0 0.0
        %2027 = vmatprep.subr.mxu0 0.0
        %2028 = vmatpush1.msra.mxu0 0.0
        %2029 = vmatprep.subr.mxu0 0.0
        %2030 = vmatpush1.msra.mxu0 0.0
        %2031 = vmatprep.subr.mxu0 0.0
        %2032 = vmatpush1.msra.mxu0 0.0
        %2033 = vmatprep.subr.mxu0 0.0
        %2034 = vmatpush1.msra.mxu0 0.0
        %2035 = vmatprep.subr.mxu0 0.0
        %2036 = vmatpush1.msra.mxu0 0.0
        %2037 = vmatprep.subr.mxu0 0.0
        %2038 = vmatpush1.msra.mxu0 0.0
        %2039 = vmatprep.subr.mxu0 0.0
        %2040 = vmatpush1.msra.mxu0 0.0
        %2041 = vmatprep.subr.mxu0 0.0
        %2042 = vmatpush1.msra.mxu0 0.0
        %2043 = vmatprep.subr.mxu0 0.0
        %2044 = vmatpush1.msra.mxu0 0.0
        %2045 = vmatprep.subr.mxu0 0.0
        %2046 = vmatpush1.msra.mxu0 0.0
        %2047 = vmatprep.subr.mxu0 0.0
        %2048 = vmatpush1.msra.mxu0 0.0
        %2049 = vmatprep.subr.mxu0 0.0
        %2050 = vmatpush1.msra.mxu0 0.0
        %2051 = vmatprep.subr.mxu0 0.0
        %2052 = vmatpush1.msra.mxu0 0.0
        %2053 = vmatprep.subr.mxu0 0.0
        %2054 = vmatpush1.msra.mxu0 0.0
        %2055 = vmatprep.subr.mxu0 0.0
        %2056 = vmatpush1.msra.mxu0 0.0
        %2057 = vmatprep.subr.mxu0 0.0
        %2058 = vmatpush1.msra.mxu0 0.0
        %2059 = vmatprep.subr.mxu0 0.0
        %2060 = vmatpush1.msra.mxu0 0.0
        %2061 = vmatprep.subr.mxu0 0.0
        %2062 = vmatpush1.msra.mxu0 0.0
        %2063 = vmatprep.subr.mxu0 0.0
        %2064 = vmatpush1.msra.mxu0 0.0
        %2065 = vmatprep.subr.mxu0 0.0
        %2066 = vmatpush1.msra.mxu0 0.0
        %2067 = vmatprep.mubr.f32.mxu0 0.0
        %2068 = vmatmul.mubr.f32.gmra.mrb[0].mxu0 %v1835
        %v2069 = vpop.f32.mrb[0].mxu0
        %v2070 = vadd.f32 0.0, %v2069
        %v2071 = vpop.f32.mrb[0].mxu0
        %v2072 = vadd.f32 0.0, %v2071
        %2073 = vdwg.mxu0
        %2074 = vmatprep.subr.mxu0 %v1809
        %2075 = vmatpush1.msra.mxu0 %v1808
        %2076 = vmatprep.subr.mxu0 %v1817
        %2077 = vmatpush1.msra.mxu0 %v1816
        %2078 = vmatprep.subr.mxu0 %v1825
        %2079 = vmatpush1.msra.mxu0 %v1824
        %2080 = vmatprep.subr.mxu0 %v1833
        %2081 = vmatpush1.msra.mxu0 %v1832
        %2082 = vmatprep.subr.mxu0 %v1859
        %2083 = vmatpush1.msra.mxu0 %v1856
        %2084 = vmatprep.subr.mxu0 0.0
        %2085 = vmatpush1.msra.mxu0 0.0
        %2086 = vmatprep.subr.mxu0 0.0
        %2087 = vmatpush1.msra.mxu0 0.0
        %2088 = vmatprep.subr.mxu0 0.0
        %2089 = vmatpush1.msra.mxu0 0.0
        %2090 = vmatprep.subr.mxu0 0.0
        %2091 = vmatpush1.msra.mxu0 0.0
        %2092 = vmatprep.subr.mxu0 0.0
        %2093 = vmatpush1.msra.mxu0 0.0
        %2094 = vmatprep.subr.mxu0 0.0
        %2095 = vmatpush1.msra.mxu0 0.0
        %2096 = vmatprep.subr.mxu0 0.0
        %2097 = vmatpush1.msra.mxu0 0.0
        %2098 = vmatprep.subr.mxu0 0.0
        %2099 = vmatpush1.msra.mxu0 0.0
        %2100 = vmatprep.subr.mxu0 0.0
        %2101 = vmatpush1.msra.mxu0 0.0
        %2102 = vmatprep.subr.mxu0 0.0
        %2103 = vmatpush1.msra.mxu0 0.0
        %2104 = vmatprep.subr.mxu0 0.0
        %2105 = vmatpush1.msra.mxu0 0.0
        %2106 = vmatprep.subr.mxu0 0.0
        %2107 = vmatpush1.msra.mxu0 0.0
        %2108 = vmatprep.subr.mxu0 0.0
        %2109 = vmatpush1.msra.mxu0 0.0
        %2110 = vmatprep.subr.mxu0 0.0
        %2111 = vmatpush1.msra.mxu0 0.0
        %2112 = vmatprep.subr.mxu0 0.0
        %2113 = vmatpush1.msra.mxu0 0.0
        %2114 = vmatprep.subr.mxu0 0.0
        %2115 = vmatpush1.msra.mxu0 0.0
        %2116 = vmatprep.subr.mxu0 0.0
        %2117 = vmatpush1.msra.mxu0 0.0
        %2118 = vmatprep.subr.mxu0 0.0
        %2119 = vmatpush1.msra.mxu0 0.0
        %2120 = vmatprep.subr.mxu0 0.0
        %2121 = vmatpush1.msra.mxu0 0.0
        %2122 = vmatprep.subr.mxu0 0.0
        %2123 = vmatpush1.msra.mxu0 0.0
        %2124 = vmatprep.subr.mxu0 0.0
        %2125 = vmatpush1.msra.mxu0 0.0
        %2126 = vmatprep.subr.mxu0 0.0
        %2127 = vmatpush1.msra.mxu0 0.0
        %2128 = vmatprep.subr.mxu0 0.0
        %2129 = vmatpush1.msra.mxu0 0.0
        %2130 = vmatprep.subr.mxu0 0.0
        %2131 = vmatpush1.msra.mxu0 0.0
        %2132 = vmatprep.subr.mxu0 0.0
        %2133 = vmatpush1.msra.mxu0 0.0
        %2134 = vmatprep.subr.mxu0 0.0
        %2135 = vmatpush1.msra.mxu0 0.0
        %2136 = vmatprep.subr.mxu0 0.0
        %2137 = vmatpush1.msra.mxu0 0.0
        %2138 = vmatprep.mubr.f32.mxu0 0.0
        %2139 = vmatmul.mubr.f32.gmra.mrb[0].mxu0 %v1835
        %v2140 = vpop.f32.mrb[0].mxu0
        %v2141 = vadd.f32 0.0, %v2140
        %v2142 = vpop.f32.mrb[0].mxu0
        %v2143 = vadd.f32 0.0, %v2142
        %2144 = vdwg.mxu0
        %2146 = vset.pattern.permute.xlu0 0
        %2147 = vperm.xlu0 %2146, %v357
        %v2148 = vpop.permute.xlu0 %2147
        %v2150 = vmul.f32 %v1928, %v2148
        %v2151 = vmul.f32 %v1930, %v2148
        %v2152 = vmul.f32 %v1999, %v2148
        %v2153 = vmul.f32 %v2001, %v2148
        %v2154 = vmul.f32 %v2070, %v2148
        %v2155 = vmul.f32 %v2072, %v2148
        %v2156 = vmul.f32 %v2141, %v2148
        %v2157 = vmul.f32 %v2143, %v2148
        %2159 = vset.pattern.permute.xlu0 0
        %2160 = vperm.xlu0 %2159, %v358
        %v2161 = vpop.permute.xlu0 %2160
        %v2163 = vadd.f32 %v2150, %v2161
        %v2164 = vadd.f32 %v2151, %v2161
        %v2165 = vadd.f32 %v2152, %v2161
        %v2166 = vadd.f32 %v2153, %v2161
        %v2167 = vadd.f32 %v2154, %v2161
        %v2168 = vadd.f32 %v2155, %v2161
        %v2169 = vadd.f32 %v2156, %v2161
        %v2170 = vadd.f32 %v2157, %v2161
        %v2171 = vadd.f32 %v2163, %v349
        %v2172 = vadd.f32 %v2164, %v373
        %v2173 = vadd.f32 %v2165, %v350
        %v2174 = vadd.f32 %v2166, %v374
        %v2175 = vadd.f32 %v2167, %v351
        %v2176 = vadd.f32 %v2168, %v375
        %v2177 = vadd.f32 %v2169, %v352
        %v2178 = vadd.f32 %v2170, %v376
        %v2179 = vmax.f32 %v2171, 0.0
        %v2180 = vmax.f32 %v2172, 0.0
        %v2181 = vmax.f32 %v2173, 0.0
        %v2182 = vmax.f32 %v2174, 0.0
        %v2183 = vmax.f32 %v2175, 0.0
        %v2184 = vmax.f32 %v2176, 0.0
        %v2185 = vmax.f32 %v2177, 0.0
        %v2186 = vmax.f32 %v2178, 0.0
        %v2195 = vcombine.low %v2179, %v2180
        %v2196 = vcombine.low %v2181, %v2182
        %v2197 = vcombine.low %v2183, %v2184
        %v2198 = vcombine.low %v2185, %v2186
        %2203 = vst [vmem:[%s348] sm:$0xff] %v2195
        %2204 = vst [vmem:[%s348 + $0x8] sm:$0xff] %v2196
        %2205 = vst [vmem:[%s348 + $0x10] sm:$0xff] %v2197
        %2206 = vst [vmem:[%s348 + $0x18] sm:$0xff] %v2198
        %s2207 = sand.u32 %s228, 1
        %s2208 = scalar_lea.sflag [#allocation4], %s2207
        %s2209 = sand.u32 %s228, 1
        %s2210 = smul.addr %s2209, 32
        %s2211 = scalar_lea.vmem [#allocation5], %s2210
        // Predicated region
        $region61: #{tpu_custom_call.1} parent=55 // pred_check
          %p2212 = pneg %p238
        $region62: #{tpu_custom_call.1} parent=55 // pred_check_branch
          %2214 = sbr.rel (%p2212) target = $region64
        $region63: #{tpu_custom_call.1} parent=55 // pred_region
          %s2216 = ssub.s32 512, 512
          %2217 = vsyncadd %s2208, %s2216
          %s2218 = smul.addr %s26, 8
          %s2219 = smul.addr %s2218, 64
          %s2220 = scalar_lea.hbm %s9, %s2219
          %s2222 = sshll.u32 %s2211, 4
          %s2223 = int_to_ptr.vmem [resolvable:$true] %s2222
          %2225 = dma.vmem_to_hbm [thread:$0]  %s2223, 512, %s2220, %s2208
        $region64: #{tpu_custom_call.1} parent=55 // pred_fallthru
          _
      $region56: #{tpu_custom_call.1} parent=5 // pred_fallthru
        _
      %p2226 = scmp.le.s32.totalorder 2, %s21
      // Predicated region
      $region65: #{tpu_custom_call.1} parent=5 // pred_check
        %p2227 = pneg %p2226
      $region66: #{tpu_custom_call.1} parent=5 // pred_check_branch
        %2229 = sbr.rel (%p2227) target = $region68
      $region67: #{tpu_custom_call.1} parent=5 // pred_region
        %s2230 = ssub.s32 %s21, 2
        // Predicated region
        $region69: #{tpu_custom_call.1} parent=67 // pred_check
          %p2231 = pneg %p244
        $region70: #{tpu_custom_call.1} parent=67 // pred_check_branch
          %2233 = sbr.rel (%p2231) target = $region72
        $region71: #{tpu_custom_call.1} parent=67 // pred_region
          %s2234 = sand.u32 %s229, 1
          %s2235 = scalar_lea.sflag [#allocation4], %s2234
          %s2236 = sand.u32 %s229, 1
          %s2237 = smul.addr %s2236, 32
          %s2238 = scalar_lea.vmem [#allocation5], %s2237
          %2239 = dma.done %s2235, 512
        $region72: #{tpu_custom_call.1} parent=67 // pred_fallthru
          _
      $region68: #{tpu_custom_call.1} parent=5 // pred_fallthru
        _
    $region6: #{tpu_custom_call.1} parent=1 // loop_footer
      %s25 = sadd.s32 1, %s21
    $region7: #{tpu_custom_call.1} parent=1 // loop_footer_branch
      %20 = sbr.rel target = $region3
    $region8: #{tpu_custom_call.1} parent=1 // loop_exit
      _
    %2240 = vsyncpa [#allocation3], 1
    %s2241 = scalar_lea.sflag [#allocation3], 1
    %2242 = vsyncpa %s2241, 1
    %2243 = vsyncpa [#allocation4], 1
    %s2244 = scalar_lea.sflag [#allocation4], 1
    %2245 = vsyncpa %s2244, 1

</llo_original>
